<compile_context>
chip_gen: v5e
topology: v5e:2x2
jax: 0.10.0
libtpu: 0.0.40
codegen_flags: <defaults>
</compile_context>

<pallas_src>
import functools

import jax
import jax.numpy as jnp
from jax.experimental import pallas as pl
from jax.experimental.pallas import tpu as pltpu

# Make the pure-JAX reference use full-f32 matmuls so it matches the kernel.
jax.config.update("jax_default_matmul_precision", "highest")

_LN_EPS = 1e-5  # PyTorch nn.LayerNorm default


# ---------------------------------------------------------------------------
# Kernel 1: fused MultiHeadAttention + output projection + residual + LayerNorm
# ---------------------------------------------------------------------------
def _mha_residual_kernel(q_ref, k_ref, v_ref,
                         wqT_ref, bq_ref, wkT_ref, bk_ref, wvT_ref, bv_ref,
                         woT_ref, bo_ref, gamma_ref, beta_ref,
                         o_ref, acc_ref, *, inv_scale, eps):
    h = pl.program_id(1)

    @pl.when(h == 0)
    def _init():
        acc_ref[...] = jnp.zeros_like(acc_ref)

    x_q = q_ref[...]          # (Sq, Dm)
    x_k = k_ref[...]          # (Sk, Dm)
    x_v = v_ref[...]          # (Sv, Dm)  (Sv == Sk); also the residual input

    # Linear projections (weights pre-transposed to (Dm, d_out) in the wrapper).
    q = jnp.dot(x_q, wqT_ref[...], preferred_element_type=jnp.float32) + bq_ref[...]
    k = jnp.dot(x_k, wkT_ref[...], preferred_element_type=jnp.float32) + bk_ref[...]
    v = jnp.dot(x_v, wvT_ref[...], preferred_element_type=jnp.float32) + bv_ref[...]

    # Fold 1/sqrt(dim_k) into q (Sq x dk elements, not Sq x Sk).
    q = q * inv_scale

    # scores = q @ k^T without materializing a transposed k.
    scores = jax.lax.dot_general(
        q, k, dimension_numbers=(((1,), (1,)), ((), ())),
        preferred_element_type=jnp.float32)

    # Numerically-stable softmax; reciprocal of the (Sq, 1) denominator +
    # broadcast multiply instead of a full (Sq, Sk) divide.
    m = jnp.max(scores, axis=-1, keepdims=True)
    e = jnp.exp(scores - m)
    denom = jnp.sum(e, axis=-1, keepdims=True)
    p = e * pl.reciprocal(denom)

    attn = jnp.dot(p, v, preferred_element_type=jnp.float32)          # (Sq, dv)
    # Fused per-head slice of the output projection, accumulated over heads.
    acc_ref[...] += jnp.dot(attn, woT_ref[...],
                            preferred_element_type=jnp.float32)       # (Sq, Dm)

    @pl.when(h == pl.num_programs(1) - 1)
    def _finalize():
        # residual add (dropout = identity in eval) + output-proj bias + LayerNorm
        y = acc_ref[...] + bo_ref[...] + x_v
        mu = jnp.mean(y, axis=-1, keepdims=True)
        d = y - mu
        var = jnp.mean(d * d, axis=-1, keepdims=True)
        y_n = d * jax.lax.rsqrt(var + eps)
        o_ref[...] = (y_n * gamma_ref[...] + beta_ref[...]).astype(o_ref.dtype)


def mha_residual(query, key, value, kp):
    """LayerNorm(value + MultiHeadAttention(query, key, value))."""
    B, Sq, Dm = query.shape
    Sk = key.shape[1]
    assert value.shape[1] == Sk and value.shape[1] == Sq, \
        "module semantics require equal query/key/value sequence lengths"
    H, _, dk = kp["wqT"].shape
    dv = kp["wvT"].shape[2]

    kernel = functools.partial(_mha_residual_kernel,
                               inv_scale=float(dk) ** -0.5, eps=_LN_EPS)

    batch_spec = lambda S: pl.BlockSpec((None, S, Dm), lambda b, h: (b, 0, 0))
    head_spec = lambda shp: pl.BlockSpec((None,) + shp, lambda b, h: (h, 0, 0))
    full_spec = lambda shp: pl.BlockSpec(shp, lambda b, h: (0, 0))

    flops = 2 * B * H * (Sq * Dm * dk + Sk * Dm * dk + Sk * Dm * dv
                         + Sq * Sk * dk + Sq * Sk * dv + Sq * dv * Dm)
    bytes_accessed = 4 * (B * (Sq + 2 * Sk) * Dm
                          + H * (2 * Dm * dk + 2 * Dm * dv + 2 * dk + dv)
                          + 3 * Dm + B * Sq * Dm)

    return pl.pallas_call(
        kernel,
        out_shape=jax.ShapeDtypeStruct((B, Sq, Dm), query.dtype),
        grid_spec=pltpu.PrefetchScalarGridSpec(
            num_scalar_prefetch=0,
            grid=(B, H),
            in_specs=[
                batch_spec(Sq),            # query
                batch_spec(Sk),            # key
                batch_spec(Sk),            # value (also residual)
                head_spec((Dm, dk)),       # WqT  (per head)
                head_spec((1, dk)),        # bq
                head_spec((Dm, dk)),       # WkT
                head_spec((1, dk)),        # bk
                head_spec((Dm, dv)),       # WvT
                head_spec((1, dv)),        # bv
                head_spec((dv, Dm)),       # WoT  (per-head slice of output proj)
                full_spec((1, Dm)),        # bo
                full_spec((1, Dm)),        # LayerNorm gamma
                full_spec((1, Dm)),        # LayerNorm beta
            ],
            out_specs=pl.BlockSpec((None, Sq, Dm), lambda b, h: (b, 0, 0)),
            scratch_shapes=[pltpu.VMEM((Sq, Dm), jnp.float32)],
        ),
        compiler_params=pltpu.CompilerParams(
            dimension_semantics=("parallel", "arbitrary")),
        cost_estimate=pl.CostEstimate(flops=flops,
                                      transcendentals=B * H * Sq * Sk,
                                      bytes_accessed=bytes_accessed),
    )(query, key, value,
      kp["wqT"], kp["bq"], kp["wkT"], kp["bk"], kp["wvT"], kp["bv"],
      kp["woT"], kp["bo"], kp["gamma"], kp["beta"])


# ---------------------------------------------------------------------------
# Kernel 2: fused FeedForward (Linear -> ReLU -> Linear) + residual + LayerNorm
# ---------------------------------------------------------------------------
def _ffn_residual_kernel(x_ref, w1T_ref, b1_ref, w2T_ref, b2_ref,
                         gamma_ref, beta_ref, o_ref, *, eps):
    x = x_ref[...]                                                     # (S, Dm)
    hdn = jnp.dot(x, w1T_ref[...], preferred_element_type=jnp.float32) + b1_ref[...]
    hdn = jnp.maximum(hdn, 0.0)
    y = jnp.dot(hdn, w2T_ref[...], preferred_element_type=jnp.float32) + b2_ref[...]
    y = y + x                               # residual (dropout = identity, eval)
    mu = jnp.mean(y, axis=-1, keepdims=True)
    d = y - mu
    var = jnp.mean(d * d, axis=-1, keepdims=True)
    o_ref[...] = (d * jax.lax.rsqrt(var + eps) * gamma_ref[...]
                  + beta_ref[...]).astype(o_ref.dtype)


def ffn_residual(x, kp):
    B, S, Dm = x.shape
    dff = kp["w1T"].shape[1]

    kernel = functools.partial(_ffn_residual_kernel, eps=_LN_EPS)
    full_spec = lambda shp: pl.BlockSpec(shp, lambda b: (0, 0))

    flops = 4 * B * S * Dm * dff
    bytes_accessed = 4 * (2 * B * S * Dm + 2 * Dm * dff + dff + 3 * Dm)

    return pl.pallas_call(
        kernel,
        out_shape=jax.ShapeDtypeStruct((B, S, Dm), x.dtype),
        grid_spec=pltpu.PrefetchScalarGridSpec(
            num_scalar_prefetch=0,
            grid=(B,),
            in_specs=[
                pl.BlockSpec((None, S, Dm), lambda b: (b, 0, 0)),   # x
                full_spec((Dm, dff)),                               # W1T
                full_spec((1, dff)),                                # b1
                full_spec((dff, Dm)),                               # W2T
                full_spec((1, Dm)),                                 # b2
                full_spec((1, Dm)),                                 # gamma
                full_spec((1, Dm)),                                 # beta
            ],
            out_specs=pl.BlockSpec((None, S, Dm), lambda b: (b, 0, 0)),
        ),
        compiler_params=pltpu.CompilerParams(
            dimension_semantics=("parallel",)),
        cost_estimate=pl.CostEstimate(flops=flops, transcendentals=0,
                                      bytes_accessed=bytes_accessed),
    )(x, kp["w1T"], kp["b1"], kp["w2T"], kp["b2"], kp["gamma"], kp["beta"])


# ---------------------------------------------------------------------------
# Parameter preparation (torch layout -> kernel layout: pre-transposed weights)
# ---------------------------------------------------------------------------
def prep_mha_params(p):
    H, dk, dm = p["wq"].shape
    dv = p["wv"].shape[1]
    return dict(
        wqT=jnp.transpose(p["wq"], (0, 2, 1)),   # (H, Dm, dk)
        bq=p["bq"].reshape(H, 1, dk),
        wkT=jnp.transpose(p["wk"], (0, 2, 1)),
        bk=p["bk"].reshape(H, 1, dk),
        wvT=jnp.transpose(p["wv"], (0, 2, 1)),   # (H, Dm, dv)
        bv=p["bv"].reshape(H, 1, dv),
        woT=p["wo"].T.reshape(H, dv, dm),        # per-head slice of Wo, transposed
        bo=p["bo"].reshape(1, dm),
        gamma=p["gamma"].reshape(1, dm),
        beta=p["beta"].reshape(1, dm),
    )


def prep_ffn_params(p):
    dff, dm = p["w1"].shape
    return dict(
        w1T=p["w1"].T,                 # (Dm, dff)
        b1=p["b1"].reshape(1, dff),
        w2T=p["w2"].T,                 # (dff, Dm)
        b2=p["b2"].reshape(1, dm),
        gamma=p["gamma"].reshape(1, dm),
        beta=p["beta"].reshape(1, dm),
    )


def transformer_decoder_layer(tgt, memory, attn1, attn2, ff):
    """Pallas forward of TransformerDecoderLayer (eval mode)."""
    a1 = prep_mha_params(attn1)
    a2 = prep_mha_params(attn2)
    fk = prep_ffn_params(ff)
    x = mha_residual(tgt, tgt, tgt, a1)            # self-attention + residual + LN
    x = mha_residual(memory, memory, x, a2)        # cross-attention + residual + LN
    return ffn_residual(x, fk)                     # FFN + residual + LN


# ---------------------------------------------------------------------------
# Pure-JAX reference mirroring the PyTorch forward (dropout = identity)
# ---------------------------------------------------------------------------
def _layer_norm_ref(x, gamma, beta, eps=_LN_EPS):
    mu = jnp.mean(x, axis=-1, keepdims=True)
    var = jnp.mean((x - mu) ** 2, axis=-1, keepdims=True)
    return (x - mu) / jnp.sqrt(var + eps) * gamma + beta


def _mha_ref(query, key, value, p):
    q = jnp.einsum("bsd,hkd->bhsk", query, p["wq"]) + p["bq"][:, None, :]
    k = jnp.einsum("bsd,hkd->bhsk", key, p["wk"]) + p["bk"][:, None, :]
    v = jnp.einsum("bsd,hvd->bhsv", value, p["wv"]) + p["bv"][:, None, :]
    scores = jnp.einsum("bhqk,bhsk->bhqs", q, k) / (q.shape[-1] ** 0.5)
    pr = jax.nn.softmax(scores, axis=-1)
    o = jnp.einsum("bhqs,bhsv->bhqv", pr, v)
    B, H, S, dv = o.shape
    o = jnp.transpose(o, (0, 2, 1, 3)).reshape(B, S, H * dv)
    return jnp.einsum("bsf,df->bsd", o, p["wo"]) + p["bo"]


def decoder_layer_ref(tgt, memory, attn1, attn2, ff):
    x = _layer_norm_ref(tgt + _mha_ref(tgt, tgt, tgt, attn1),
                        attn1["gamma"], attn1["beta"])
    x = _layer_norm_ref(x + _mha_ref(memory, memory, x, attn2),
                        attn2["gamma"], attn2["beta"])
    h = jnp.maximum(jnp.einsum("bsd,fd->bsf", x, ff["w1"]) + ff["b1"], 0.0)
    y = jnp.einsum("bsf,df->bsd", h, ff["w2"]) + ff["b2"]
    return _layer_norm_ref(x + y, ff["gamma"], ff["beta"])


# ---------------------------------------------------------------------------
if __name__ == "__main__":
    # Small shapes consistent with the module; dim_model kept lane-dense (128).
    B, S = 2, 8
    dim_model, num_heads, dim_ff = 128, 4, 256
    dk = dv = dim_model // num_heads   # 32

    keys = iter(jax.random.split(jax.random.PRNGKey(0), 40))

    def nrm(shape, scale=0.1):
        return scale * jax.random.normal(next(keys), shape, jnp.float32)

    tgt = jax.random.normal(next(keys), (B, S, dim_model), jnp.float32)
    memory = jax.random.normal(next(keys), (B, S, dim_model), jnp.float32)

    def make_mha_params():
        return dict(
            wq=nrm((num_heads, dk, dim_model)), bq=nrm((num_heads, dk)),
            wk=nrm((num_heads, dk, dim_model)), bk=nrm((num_heads, dk)),
            wv=nrm((num_heads, dv, dim_model)), bv=nrm((num_heads, dv)),
            wo=nrm((dim_model, num_heads * dv)), bo=nrm((dim_model,)),
            gamma=1.0 + nrm((dim_model,)), beta=nrm((dim_model,)),
        )

    attn1 = make_mha_params()
    attn2 = make_mha_params()
    ff = dict(
        w1=nrm((dim_ff, dim_model)), b1=nrm((dim_ff,)),
        w2=nrm((dim_model, dim_ff)), b2=nrm((dim_model,)),
        gamma=1.0 + nrm((dim_model,)), beta=nrm((dim_model,)),
    )

    out = transformer_decoder_layer(tgt, memory, attn1, attn2, ff)
    out = jax.block_until_ready(out)

    ref = decoder_layer_ref(tgt, memory, attn1, attn2, ff)
    assert out.shape == (B, S, dim_model)
    assert jnp.allclose(out, ref, atol=2e-3, rtol=2e-3), "mismatch vs reference"

    print("KERNEL_OK")
</pallas_src>

<mosaic_0001>
module attributes {stable_mosaic.version = 11 : i64} {
  func.func @_mha_residual_kernel(%arg0: i32, %arg1: i32, %arg2: memref<1x8x128xf32, #tpu.memory_space<vmem>>, %arg3: memref<1x8x128xf32, #tpu.memory_space<vmem>>, %arg4: memref<1x8x128xf32, #tpu.memory_space<vmem>>, %arg5: memref<1x128x32xf32, #tpu.memory_space<vmem>>, %arg6: memref<1x1x32xf32, #tpu.memory_space<vmem>>, %arg7: memref<1x128x32xf32, #tpu.memory_space<vmem>>, %arg8: memref<1x1x32xf32, #tpu.memory_space<vmem>>, %arg9: memref<1x128x32xf32, #tpu.memory_space<vmem>>, %arg10: memref<1x1x32xf32, #tpu.memory_space<vmem>>, %arg11: memref<1x32x128xf32, #tpu.memory_space<vmem>>, %arg12: memref<1x128xf32, #tpu.memory_space<vmem>>, %arg13: memref<1x128xf32, #tpu.memory_space<vmem>>, %arg14: memref<1x128xf32, #tpu.memory_space<vmem>>, %arg15: memref<1x8x128xf32, #tpu.memory_space<vmem>>, %arg16: memref<8x128xf32, #tpu.memory_space<vmem>>) attributes {dimension_semantics = [#tpu.dimension_semantics<parallel>, #tpu.dimension_semantics<arbitrary>], iteration_bounds = array<i64: 2, 4>, scalar_prefetch = 0 : i64, scratch_operands = 1 : i64, tpu.core_type = #tpu.core_type<tc>, window_params = [{transform_indices = @transform_0, window_bounds = array<i64: 1, 8, 128>}, {transform_indices = @transform_1, window_bounds = array<i64: 1, 8, 128>}, {transform_indices = @transform_2, window_bounds = array<i64: 1, 8, 128>}, {transform_indices = @transform_3, window_bounds = array<i64: 1, 128, 32>}, {transform_indices = @transform_4, window_bounds = array<i64: 1, 1, 32>}, {transform_indices = @transform_5, window_bounds = array<i64: 1, 128, 32>}, {transform_indices = @transform_6, window_bounds = array<i64: 1, 1, 32>}, {transform_indices = @transform_7, window_bounds = array<i64: 1, 128, 32>}, {transform_indices = @transform_8, window_bounds = array<i64: 1, 1, 32>}, {transform_indices = @transform_9, window_bounds = array<i64: 1, 32, 128>}, {pipeline_mode = #tpu.pipeline_mode<synchronous>, transform_indices = @transform_10, window_bounds = array<i64: 1, 128>}, {pipeline_mode = #tpu.pipeline_mode<synchronous>, transform_indices = @transform_11, window_bounds = array<i64: 1, 128>}, {pipeline_mode = #tpu.pipeline_mode<synchronous>, transform_indices = @transform_12, window_bounds = array<i64: 1, 128>}, {transform_indices = @transform_13, window_bounds = array<i64: 1, 8, 128>}]} {
    %c0_i32 = arith.constant 0 : i32
    %0 = arith.cmpi eq, %arg1, %c0_i32 : i32
    %1 = arith.extui %0 : i1 to i32
    %c0_i32_0 = arith.constant 0 : i32
    %2 = arith.cmpi ne, %1, %c0_i32_0 : i32
    scf.if %2 {
      %cst_43 = arith.constant 0.000000e+00 : f32
      %53 = vector.broadcast %cst_43 : f32 to vector<8x128xf32>
      %c0_44 = arith.constant 0 : index
      %c0_45 = arith.constant 0 : index
      %54 = vector.load %arg16[%c0_44, %c0_45] : memref<8x128xf32, #tpu.memory_space<vmem>>, vector<8x128xf32>
      tpu.vector_store %arg16[%c0_44, %c0_45], %53 {strides = array<i32>} : memref<8x128xf32, #tpu.memory_space<vmem>>, vector<8x128xf32>,
    } else {
    }
    %c0 = arith.constant 0 : index
    %c0_1 = arith.constant 0 : index
    %c0_2 = arith.constant 0 : index
    %3 = vector.load %arg2[%c0, %c0_1, %c0_2] : memref<1x8x128xf32, #tpu.memory_space<vmem>>, vector<1x8x128xf32>
    %4 = vector.shape_cast %3 : vector<1x8x128xf32> to vector<8x128xf32>
    %c0_3 = arith.constant 0 : index
    %c0_4 = arith.constant 0 : index
    %c0_5 = arith.constant 0 : index
    %5 = vector.load %arg3[%c0_3, %c0_4, %c0_5] : memref<1x8x128xf32, #tpu.memory_space<vmem>>, vector<1x8x128xf32>
    %6 = vector.shape_cast %5 : vector<1x8x128xf32> to vector<8x128xf32>
    %c0_6 = arith.constant 0 : index
    %c0_7 = arith.constant 0 : index
    %c0_8 = arith.constant 0 : index
    %7 = vector.load %arg4[%c0_6, %c0_7, %c0_8] : memref<1x8x128xf32, #tpu.memory_space<vmem>>, vector<1x8x128xf32>
    %8 = vector.shape_cast %7 : vector<1x8x128xf32> to vector<8x128xf32>
    %c0_9 = arith.constant 0 : index
    %c0_10 = arith.constant 0 : index
    %c0_11 = arith.constant 0 : index
    %9 = vector.load %arg5[%c0_9, %c0_10, %c0_11] : memref<1x128x32xf32, #tpu.memory_space<vmem>>, vector<1x128x32xf32>
    %10 = vector.shape_cast %9 : vector<1x128x32xf32> to vector<128x32xf32>
    %cst = arith.constant dense<0.000000e+00> : vector<8x32xf32>
    %11 = tpu.matmul %4, %10, %cst {dimension_numbers = #tpu.dot_dimension_numbers<[1], [0], [0], [1], [0, 0, 1, 1], [], []>, precision = #tpu.contract_precision<fp32>} : vector<8x128xf32>, vector<128x32xf32>, vector<8x32xf32> -> vector<8x32xf32>
    %c0_12 = arith.constant 0 : index
    %c0_13 = arith.constant 0 : index
    %c0_14 = arith.constant 0 : index
    %12 = vector.load %arg6[%c0_12, %c0_13, %c0_14] : memref<1x1x32xf32, #tpu.memory_space<vmem>>, vector<1x1x32xf32>
    %13 = vector.shape_cast %12 : vector<1x1x32xf32> to vector<1x32xf32>
    %14 = vector.broadcast %13 : vector<1x32xf32> to vector<8x32xf32>
    %15 = arith.addf %11, %14 : vector<8x32xf32>
    %c0_15 = arith.constant 0 : index
    %c0_16 = arith.constant 0 : index
    %c0_17 = arith.constant 0 : index
    %16 = vector.load %arg7[%c0_15, %c0_16, %c0_17] : memref<1x128x32xf32, #tpu.memory_space<vmem>>, vector<1x128x32xf32>
    %17 = vector.shape_cast %16 : vector<1x128x32xf32> to vector<128x32xf32>
    %cst_18 = arith.constant dense<0.000000e+00> : vector<8x32xf32>
    %18 = tpu.matmul %6, %17, %cst_18 {dimension_numbers = #tpu.dot_dimension_numbers<[1], [0], [0], [1], [0, 0, 1, 1], [], []>, precision = #tpu.contract_precision<fp32>} : vector<8x128xf32>, vector<128x32xf32>, vector<8x32xf32> -> vector<8x32xf32>
    %c0_19 = arith.constant 0 : index
    %c0_20 = arith.constant 0 : index
    %c0_21 = arith.constant 0 : index
    %19 = vector.load %arg8[%c0_19, %c0_20, %c0_21] : memref<1x1x32xf32, #tpu.memory_space<vmem>>, vector<1x1x32xf32>
    %20 = vector.shape_cast %19 : vector<1x1x32xf32> to vector<1x32xf32>
    %21 = vector.broadcast %20 : vector<1x32xf32> to vector<8x32xf32>
    %22 = arith.addf %18, %21 : vector<8x32xf32>
    %c0_22 = arith.constant 0 : index
    %c0_23 = arith.constant 0 : index
    %c0_24 = arith.constant 0 : index
    %23 = vector.load %arg9[%c0_22, %c0_23, %c0_24] : memref<1x128x32xf32, #tpu.memory_space<vmem>>, vector<1x128x32xf32>
    %24 = vector.shape_cast %23 : vector<1x128x32xf32> to vector<128x32xf32>
    %cst_25 = arith.constant dense<0.000000e+00> : vector<8x32xf32>
    %25 = tpu.matmul %8, %24, %cst_25 {dimension_numbers = #tpu.dot_dimension_numbers<[1], [0], [0], [1], [0, 0, 1, 1], [], []>, precision = #tpu.contract_precision<fp32>} : vector<8x128xf32>, vector<128x32xf32>, vector<8x32xf32> -> vector<8x32xf32>
    %c0_26 = arith.constant 0 : index
    %c0_27 = arith.constant 0 : index
    %c0_28 = arith.constant 0 : index
    %26 = vector.load %arg10[%c0_26, %c0_27, %c0_28] : memref<1x1x32xf32, #tpu.memory_space<vmem>>, vector<1x1x32xf32>
    %27 = vector.shape_cast %26 : vector<1x1x32xf32> to vector<1x32xf32>
    %28 = vector.broadcast %27 : vector<1x32xf32> to vector<8x32xf32>
    %29 = arith.addf %25, %28 : vector<8x32xf32>
    %cst_29 = arith.constant 0.176776692 : f32
    %30 = vector.broadcast %cst_29 : f32 to vector<8x32xf32>
    %31 = arith.mulf %15, %30 : vector<8x32xf32>
    %cst_30 = arith.constant dense<0.000000e+00> : vector<8x8xf32>
    %32 = tpu.matmul %31, %22, %cst_30 {dimension_numbers = #tpu.dot_dimension_numbers<[1], [1], [0], [0], [0, 0, 1, 0], [], []>, precision = #tpu.contract_precision<fp32>} : vector<8x32xf32>, vector<8x32xf32>, vector<8x8xf32> -> vector<8x8xf32>
    %cst_31 = arith.constant dense<0xFF800000> : vector<8xf32>
    %33 = vector.multi_reduction <maximumf>, %32, %cst_31 [1] : vector<8x8xf32> to vector<8xf32>
    %34 = vector.shape_cast %33 : vector<8xf32> to vector<8x1xf32>
    %35 = vector.broadcast %34 : vector<8x1xf32> to vector<8x8xf32>
    %36 = arith.subf %32, %35 : vector<8x8xf32>
    %37 = math.exp %36 : vector<8x8xf32>
    %cst_32 = arith.constant dense<0.000000e+00> : vector<8xf32>
    %38 = vector.multi_reduction <add>, %37, %cst_32 [1] : vector<8x8xf32> to vector<8xf32>
    %39 = vector.shape_cast %38 : vector<8xf32> to vector<8x1xf32>
    %40 = tpu.reciprocal %39 : vector<8x1xf32> -> vector<8x1xf32>
    %41 = vector.broadcast %40 : vector<8x1xf32> to vector<8x8xf32>
    %42 = arith.mulf %37, %41 : vector<8x8xf32>
    %cst_33 = arith.constant dense<0.000000e+00> : vector<8x32xf32>
    %43 = tpu.matmul %42, %29, %cst_33 {dimension_numbers = #tpu.dot_dimension_numbers<[1], [0], [0], [1], [0, 0, 1, 1], [], []>, precision = #tpu.contract_precision<fp32>} : vector<8x8xf32>, vector<8x32xf32>, vector<8x32xf32> -> vector<8x32xf32>
    %c0_34 = arith.constant 0 : index
    %c0_35 = arith.constant 0 : index
    %44 = vector.load %arg16[%c0_34, %c0_35] : memref<8x128xf32, #tpu.memory_space<vmem>>, vector<8x128xf32>
    %c0_36 = arith.constant 0 : index
    %c0_37 = arith.constant 0 : index
    %c0_38 = arith.constant 0 : index
    %45 = vector.load %arg11[%c0_36, %c0_37, %c0_38] : memref<1x32x128xf32, #tpu.memory_space<vmem>>, vector<1x32x128xf32>
    %46 = vector.shape_cast %45 : vector<1x32x128xf32> to vector<32x128xf32>
    %cst_39 = arith.constant dense<0.000000e+00> : vector<8x128xf32>
    %47 = tpu.matmul %43, %46, %cst_39 {dimension_numbers = #tpu.dot_dimension_numbers<[1], [0], [0], [1], [0, 0, 1, 1], [], []>, precision = #tpu.contract_precision<fp32>} : vector<8x32xf32>, vector<32x128xf32>, vector<8x128xf32> -> vector<8x128xf32>
    %48 = arith.addf %44, %47 : vector<8x128xf32>
    %c0_40 = arith.constant 0 : index
    %c0_41 = arith.constant 0 : index
    %49 = vector.load %arg16[%c0_40, %c0_41] : memref<8x128xf32, #tpu.memory_space<vmem>>, vector<8x128xf32>
    tpu.vector_store %arg16[%c0_40, %c0_41], %48 {strides = array<i32>} : memref<8x128xf32, #tpu.memory_space<vmem>>, vector<8x128xf32>,
    %c3_i32 = arith.constant 3 : i32
    %50 = arith.cmpi eq, %arg1, %c3_i32 : i32
    %51 = arith.extui %50 : i1 to i32
    %c0_i32_42 = arith.constant 0 : i32
    %52 = arith.cmpi ne, %51, %c0_i32_42 : i32
    scf.if %52 {
      %c0_43 = arith.constant 0 : index
      %c0_44 = arith.constant 0 : index
      %53 = vector.load %arg16[%c0_43, %c0_44] : memref<8x128xf32, #tpu.memory_space<vmem>>, vector<8x128xf32>
      %c0_45 = arith.constant 0 : index
      %c0_46 = arith.constant 0 : index
      %54 = vector.load %arg12[%c0_45, %c0_46] : memref<1x128xf32, #tpu.memory_space<vmem>>, vector<1x128xf32>
      %55 = vector.broadcast %54 : vector<1x128xf32> to vector<8x128xf32>
      %56 = arith.addf %53, %55 : vector<8x128xf32>
      %57 = arith.addf %56, %8 : vector<8x128xf32>
      %cst_47 = arith.constant dense<0.000000e+00> : vector<8xf32>
      %58 = vector.multi_reduction <add>, %57, %cst_47 [1] : vector<8x128xf32> to vector<8xf32>
      %59 = vector.shape_cast %58 : vector<8xf32> to vector<8x1xf32>
      %cst_48 = arith.constant 1.280000e+02 : f32
      %60 = vector.broadcast %cst_48 : f32 to vector<8x1xf32>
      %61 = arith.divf %59, %60 : vector<8x1xf32>
      %62 = vector.broadcast %61 : vector<8x1xf32> to vector<8x128xf32>
      %63 = arith.subf %57, %62 : vector<8x128xf32>
      %64 = arith.mulf %63, %63 : vector<8x128xf32>
      %cst_49 = arith.constant dense<0.000000e+00> : vector<8xf32>
      %65 = vector.multi_reduction <add>, %64, %cst_49 [1] : vector<8x128xf32> to vector<8xf32>
      %66 = vector.shape_cast %65 : vector<8xf32> to vector<8x1xf32>
      %cst_50 = arith.constant 1.280000e+02 : f32
      %67 = vector.broadcast %cst_50 : f32 to vector<8x1xf32>
      %68 = arith.divf %66, %67 : vector<8x1xf32>
      %cst_51 = arith.constant 9.99999974E-6 : f32
      %69 = vector.broadcast %cst_51 : f32 to vector<8x1xf32>
      %70 = arith.addf %68, %69 : vector<8x1xf32>
      %71 = math.rsqrt %70 : vector<8x1xf32>
      %72 = vector.broadcast %71 : vector<8x1xf32> to vector<8x128xf32>
      %73 = arith.mulf %63, %72 : vector<8x128xf32>
      %c0_52 = arith.constant 0 : index
      %c0_53 = arith.constant 0 : index
      %74 = vector.load %arg13[%c0_52, %c0_53] : memref<1x128xf32, #tpu.memory_space<vmem>>, vector<1x128xf32>
      %75 = vector.broadcast %74 : vector<1x128xf32> to vector<8x128xf32>
      %76 = arith.mulf %73, %75 : vector<8x128xf32>
      %c0_54 = arith.constant 0 : index
      %c0_55 = arith.constant 0 : index
      %77 = vector.load %arg14[%c0_54, %c0_55] : memref<1x128xf32, #tpu.memory_space<vmem>>, vector<1x128xf32>
      %78 = vector.broadcast %77 : vector<1x128xf32> to vector<8x128xf32>
      %79 = arith.addf %76, %78 : vector<8x128xf32>
      %c0_56 = arith.constant 0 : index
      %c0_57 = arith.constant 0 : index
      %c0_58 = arith.constant 0 : index
      %80 = vector.load %arg15[%c0_56, %c0_57, %c0_58] : memref<1x8x128xf32, #tpu.memory_space<vmem>>, vector<1x8x128xf32>
      %81 = vector.shape_cast %80 : vector<1x8x128xf32> to vector<8x128xf32>
      %82 = vector.shape_cast %79 : vector<8x128xf32> to vector<1x8x128xf32>
      tpu.vector_store %arg15[%c0_56, %c0_57, %c0_58], %82 {strides = array<i32>} : memref<1x8x128xf32, #tpu.memory_space<vmem>>, vector<1x8x128xf32>,
    } else {
    }
    return
  }
  func.func @transform_0(%arg0: i32, %arg1: i32) -> (i32, i32, i32) {
    %c0_i32 = arith.constant 0 : i32
    %c0_i32_0 = arith.constant 0 : i32
    %c0_i32_1 = arith.constant 0 : i32
    return %arg0, %c0_i32, %c0_i32_0 : i32, i32, i32
  }
  func.func @transform_1(%arg0: i32, %arg1: i32) -> (i32, i32, i32) {
    %c0_i32 = arith.constant 0 : i32
    %c0_i32_0 = arith.constant 0 : i32
    %c0_i32_1 = arith.constant 0 : i32
    return %arg0, %c0_i32, %c0_i32_0 : i32, i32, i32
  }
  func.func @transform_2(%arg0: i32, %arg1: i32) -> (i32, i32, i32) {
    %c0_i32 = arith.constant 0 : i32
    %c0_i32_0 = arith.constant 0 : i32
    %c0_i32_1 = arith.constant 0 : i32
    return %arg0, %c0_i32, %c0_i32_0 : i32, i32, i32
  }
  func.func @transform_3(%arg0: i32, %arg1: i32) -> (i32, i32, i32) {
    %c0_i32 = arith.constant 0 : i32
    %c0_i32_0 = arith.constant 0 : i32
    %c0_i32_1 = arith.constant 0 : i32
    return %arg1, %c0_i32, %c0_i32_0 : i32, i32, i32
  }
  func.func @transform_4(%arg0: i32, %arg1: i32) -> (i32, i32, i32) {
    %c0_i32 = arith.constant 0 : i32
    %c0_i32_0 = arith.constant 0 : i32
    %c0_i32_1 = arith.constant 0 : i32
    return %arg1, %c0_i32, %c0_i32_0 : i32, i32, i32
  }
  func.func @transform_5(%arg0: i32, %arg1: i32) -> (i32, i32, i32) {
    %c0_i32 = arith.constant 0 : i32
    %c0_i32_0 = arith.constant 0 : i32
    %c0_i32_1 = arith.constant 0 : i32
    return %arg1, %c0_i32, %c0_i32_0 : i32, i32, i32
  }
  func.func @transform_6(%arg0: i32, %arg1: i32) -> (i32, i32, i32) {
    %c0_i32 = arith.constant 0 : i32
    %c0_i32_0 = arith.constant 0 : i32
    %c0_i32_1 = arith.constant 0 : i32
    return %arg1, %c0_i32, %c0_i32_0 : i32, i32, i32
  }
  func.func @transform_7(%arg0: i32, %arg1: i32) -> (i32, i32, i32) {
    %c0_i32 = arith.constant 0 : i32
    %c0_i32_0 = arith.constant 0 : i32
    %c0_i32_1 = arith.constant 0 : i32
    return %arg1, %c0_i32, %c0_i32_0 : i32, i32, i32
  }
  func.func @transform_8(%arg0: i32, %arg1: i32) -> (i32, i32, i32) {
    %c0_i32 = arith.constant 0 : i32
    %c0_i32_0 = arith.constant 0 : i32
    %c0_i32_1 = arith.constant 0 : i32
    return %arg1, %c0_i32, %c0_i32_0 : i32, i32, i32
  }
  func.func @transform_9(%arg0: i32, %arg1: i32) -> (i32, i32, i32) {
    %c0_i32 = arith.constant 0 : i32
    %c0_i32_0 = arith.constant 0 : i32
    %c0_i32_1 = arith.constant 0 : i32
    return %arg1, %c0_i32, %c0_i32_0 : i32, i32, i32
  }
  func.func @transform_10(%arg0: i32, %arg1: i32) -> (i32, i32) {
    %c0_i32 = arith.constant 0 : i32
    %c0_i32_0 = arith.constant 0 : i32
    %c0_i32_1 = arith.constant 0 : i32
    return %c0_i32, %c0_i32_0 : i32, i32
  }
  func.func @transform_11(%arg0: i32, %arg1: i32) -> (i32, i32) {
    %c0_i32 = arith.constant 0 : i32
    %c0_i32_0 = arith.constant 0 : i32
    %c0_i32_1 = arith.constant 0 : i32
    return %c0_i32, %c0_i32_0 : i32, i32
  }
  func.func @transform_12(%arg0: i32, %arg1: i32) -> (i32, i32) {
    %c0_i32 = arith.constant 0 : i32
    %c0_i32_0 = arith.constant 0 : i32
    %c0_i32_1 = arith.constant 0 : i32
    return %c0_i32, %c0_i32_0 : i32, i32
  }
  func.func @transform_13(%arg0: i32, %arg1: i32) -> (i32, i32, i32) {
    %c0_i32 = arith.constant 0 : i32
    %c0_i32_0 = arith.constant 0 : i32
    %c0_i32_1 = arith.constant 0 : i32
    return %arg0, %c0_i32, %c0_i32_0 : i32, i32, i32
  }
}

</mosaic_0001>

<llo_original>
// kernel: tpu_custom_call.1
$region0: #{tpu_custom_call.1}
  #allocation0 [shape = 'u32[]', space=smem, size = 0x4, offset = 0x4, fixed_abs, tag = 'smem constant byte address 0x4 - core index']
  #allocation1 [shape = 'u32[72,128]{1,0:T(1,128)}', space=vmem, size = 0x9000, scoped, tag = 'internal scratch']
  #allocation2 [shape = 'f32[8,128]{1,0:T(8,128)}', space=vmem, size = 0x1000, scoped, tag = 'scratch operand']
  %s0 = inlined_call_operand.vmem [shape: f32[2,8,128], index: 0, kind: input, shape index: {}]
  %s1 = inlined_call_operand.vmem [shape: f32[2,8,128], index: 1, kind: input, shape index: {}]
  %s2 = inlined_call_operand.vmem [shape: f32[2,8,128], index: 2, kind: input, shape index: {}]
  %s3 = inlined_call_operand.vmem [shape: f32[4,128,32], index: 3, kind: input, shape index: {}]
  %s4 = inlined_call_operand.vmem [shape: f32[4,1,32], index: 4, kind: input, shape index: {}]
  %s5 = inlined_call_operand.vmem [shape: f32[4,128,32], index: 5, kind: input, shape index: {}]
  %s6 = inlined_call_operand.vmem [shape: f32[4,1,32], index: 6, kind: input, shape index: {}]
  %s7 = inlined_call_operand.vmem [shape: f32[4,128,32], index: 7, kind: input, shape index: {}]
  %s8 = inlined_call_operand.vmem [shape: f32[4,1,32], index: 8, kind: input, shape index: {}]
  %s9 = inlined_call_operand.vmem [shape: f32[4,32,128], index: 9, kind: input, shape index: {}]
  %s10 = inlined_call_operand.vmem [shape: f32[1,128], index: 10, kind: input, shape index: {}]
  %s11 = inlined_call_operand.vmem [shape: f32[1,128], index: 11, kind: input, shape index: {}]
  %s12 = inlined_call_operand.vmem [shape: f32[1,128], index: 12, kind: input, shape index: {}]
  %s13 = inlined_call_operand.hbm [shape: f32[2,8,128], index: 13, kind: output, shape index: {}]
  %s14 = sld [smem:[#allocation0]]
  $region93: #{tpu_custom_call.1} parent=0
    _
  %s16 = ssub.s32 1, %s14
  %s17 = scalar_select 0, %s16, %s14
  $region1: #{tpu_custom_call.1} parent=0
    #allocation3 [shape = 'u8[8192]{0}', space=vmem, size = 0x2000, scoped, tag = 'output window, operand 0']
    #allocation4 [shape = 's32[2]{0}', space=sflag, size = 0x8, scoped, tag = 'scoped memory for tpu_custom_call.1']
    %18 = vsyncpa [#allocation4], 0
    %s19 = scalar_lea.sflag [#allocation4], 1
    %20 = vsyncpa %s19, 0
    loop: start=0, step=1, limit=10
    $region2: #{tpu_custom_call.1} parent=1 // loop_pre_header
      _
    $region3: #{tpu_custom_call.1} parent=1 // loop_header
      %s22 = sphi 0, %s26
      %p23 = scmp.ge.s32.totalorder %s22, 10
      %s29 = sphi 0, %s41
      %s30 = sphi 0, %s37
      %s31 = sphi 0, %s29
      %s32 = sphi 0, %s30
      %s33 = sphi 0, %s31
      %s34 = sphi 0, %s32
      %s44 = sphi 0, %s46
      %s47 = sphi 0, %s44
      %s48 = sphi 0, %s47
      %s64 = sphi 0, %s48
      %s70 = sphi 0, %s72
      %s73 = sphi 0, %s70
      %s74 = sphi 0, %s73
      %s90 = sphi 0, %s74
      %s96 = sphi 0, %s98
      %s99 = sphi 0, %s96
      %s100 = sphi 0, %s99
      %s116 = sphi 0, %s100
      %s122 = sphi 0, %s124
      %s125 = sphi 0, %s122
      %s126 = sphi 0, %s125
      %s142 = sphi 0, %s126
      %s148 = sphi 0, %s150
      %s151 = sphi 0, %s148
      %s152 = sphi 0, %s151
      %s168 = sphi 0, %s152
      %s174 = sphi 0, %s176
      %s177 = sphi 0, %s174
      %s178 = sphi 0, %s177
      %s194 = sphi 0, %s178
      %s200 = sphi 0, %s202
      %s203 = sphi 0, %s200
      %s204 = sphi 0, %s203
      %s220 = sphi 0, %s204
      %s226 = sphi 0, %s228
      %s229 = sphi 0, %s226
      %s230 = sphi 0, %s229
      %s246 = sphi 0, %s230
      %s252 = sphi 0, %s254
      %s255 = sphi 0, %s252
      %s256 = sphi 0, %s255
      %s272 = sphi 0, %s256
      %s278 = sphi 0, %s280
      %s281 = sphi 0, %s278
      %s282 = sphi 0, %s281
      %s298 = sphi 0, %s282
      %s302 = sphi 0, %s302
      %s304 = sphi 0, %s302
      %s305 = sphi 0, %s304
      %s319 = sphi 0, %s305
      %s323 = sphi 0, %s323
      %s325 = sphi 0, %s323
      %s326 = sphi 0, %s325
      %s340 = sphi 0, %s326
      %s344 = sphi 0, %s344
      %s346 = sphi 0, %s344
      %s347 = sphi 0, %s346
      %s361 = sphi 0, %s347
      %s367 = sphi 0, %s369
      %s370 = sphi 0, %s367
      %s371 = sphi 0, %s370
      %s387 = sphi 0, %s371
    $region4: #{tpu_custom_call.1} parent=1 // loop_header_branch
      %25 = sbr.rel (%p23) target = $region8
    $region5: #{tpu_custom_call.1} parent=1 // loop_body
      %s27 = ssub.s32 %s22, 1
      %s28 = ssub.s32 %s22, 2
      %s35 = sadd.s32 1, %s30
      %p36 = scmp.ge.s32.totalorder %s35, 4
      %s37 = scalar_select %p36, 0, %s35
      %s38 = sadd.s32 1, %s29
      %s39 = scalar_select %p36, %s38, %s29
      %p40 = scmp.ge.s32.totalorder %s39, 2
      %s41 = scalar_select %p40, 0, %s39
      %s42 = ssub.s32 %s29, %s41
      %p43 = scmp.eq.s32.totalorder %s42, 0
      %s45 = sadd.s32 %s44, 1
      %s46 = scalar_select %p43, %s44, %s45
      %p49 = pneg %p43
      %p50 = scmp.eq.s32.totalorder %s22, 7
      %p51 = por %p49, %p50
      %p52 = scmp.ne.s32.totalorder %s44, %s47
      %p53 = scmp.eq.s32.totalorder %s22, 0
      %p54 = por %p52, %p53
      %p55 = scmp.ne.s32.totalorder %s44, %s47
      %p56 = scmp.eq.s32.totalorder %s27, 7
      %p57 = por %p55, %p56
      %p58 = scmp.ne.s32.totalorder %s47, %s48
      %p59 = scmp.eq.s32.totalorder %s27, 0
      %p60 = por %p58, %p59
      %p61 = scmp.ne.s32.totalorder %s47, %s48
      %p62 = scmp.eq.s32.totalorder %s28, 7
      %p63 = por %p61, %p62
      %p65 = scmp.ne.s32.totalorder %s48, %s64
      %p66 = scmp.eq.s32.totalorder %s28, 0
      %p67 = por %p65, %p66
      %s68 = ssub.s32 %s29, %s41
      %p69 = scmp.eq.s32.totalorder %s68, 0
      %s71 = sadd.s32 %s70, 1
      %s72 = scalar_select %p69, %s70, %s71
      %p75 = pneg %p69
      %p76 = scmp.eq.s32.totalorder %s22, 7
      %p77 = por %p75, %p76
      %p78 = scmp.ne.s32.totalorder %s70, %s73
      %p79 = scmp.eq.s32.totalorder %s22, 0
      %p80 = por %p78, %p79
      %p81 = scmp.ne.s32.totalorder %s70, %s73
      %p82 = scmp.eq.s32.totalorder %s27, 7
      %p83 = por %p81, %p82
      %p84 = scmp.ne.s32.totalorder %s73, %s74
      %p85 = scmp.eq.s32.totalorder %s27, 0
      %p86 = por %p84, %p85
      %p87 = scmp.ne.s32.totalorder %s73, %s74
      %p88 = scmp.eq.s32.totalorder %s28, 7
      %p89 = por %p87, %p88
      %p91 = scmp.ne.s32.totalorder %s74, %s90
      %p92 = scmp.eq.s32.totalorder %s28, 0
      %p93 = por %p91, %p92
      %s94 = ssub.s32 %s29, %s41
      %p95 = scmp.eq.s32.totalorder %s94, 0
      %s97 = sadd.s32 %s96, 1
      %s98 = scalar_select %p95, %s96, %s97
      %p101 = pneg %p95
      %p102 = scmp.eq.s32.totalorder %s22, 7
      %p103 = por %p101, %p102
      %p104 = scmp.ne.s32.totalorder %s96, %s99
      %p105 = scmp.eq.s32.totalorder %s22, 0
      %p106 = por %p104, %p105
      %p107 = scmp.ne.s32.totalorder %s96, %s99
      %p108 = scmp.eq.s32.totalorder %s27, 7
      %p109 = por %p107, %p108
      %p110 = scmp.ne.s32.totalorder %s99, %s100
      %p111 = scmp.eq.s32.totalorder %s27, 0
      %p112 = por %p110, %p111
      %p113 = scmp.ne.s32.totalorder %s99, %s100
      %p114 = scmp.eq.s32.totalorder %s28, 7
      %p115 = por %p113, %p114
      %p117 = scmp.ne.s32.totalorder %s100, %s116
      %p118 = scmp.eq.s32.totalorder %s28, 0
      %p119 = por %p117, %p118
      %s120 = ssub.s32 %s30, %s37
      %p121 = scmp.eq.s32.totalorder %s120, 0
      %s123 = sadd.s32 %s122, 1
      %s124 = scalar_select %p121, %s122, %s123
      %p127 = pneg %p121
      %p128 = scmp.eq.s32.totalorder %s22, 7
      %p129 = por %p127, %p128
      %p130 = scmp.ne.s32.totalorder %s122, %s125
      %p131 = scmp.eq.s32.totalorder %s22, 0
      %p132 = por %p130, %p131
      %p133 = scmp.ne.s32.totalorder %s122, %s125
      %p134 = scmp.eq.s32.totalorder %s27, 7
      %p135 = por %p133, %p134
      %p136 = scmp.ne.s32.totalorder %s125, %s126
      %p137 = scmp.eq.s32.totalorder %s27, 0
      %p138 = por %p136, %p137
      %p139 = scmp.ne.s32.totalorder %s125, %s126
      %p140 = scmp.eq.s32.totalorder %s28, 7
      %p141 = por %p139, %p140
      %p143 = scmp.ne.s32.totalorder %s126, %s142
      %p144 = scmp.eq.s32.totalorder %s28, 0
      %p145 = por %p143, %p144
      %s146 = ssub.s32 %s30, %s37
      %p147 = scmp.eq.s32.totalorder %s146, 0
      %s149 = sadd.s32 %s148, 1
      %s150 = scalar_select %p147, %s148, %s149
      %p153 = pneg %p147
      %p154 = scmp.eq.s32.totalorder %s22, 7
      %p155 = por %p153, %p154
      %p156 = scmp.ne.s32.totalorder %s148, %s151
      %p157 = scmp.eq.s32.totalorder %s22, 0
      %p158 = por %p156, %p157
      %p159 = scmp.ne.s32.totalorder %s148, %s151
      %p160 = scmp.eq.s32.totalorder %s27, 7
      %p161 = por %p159, %p160
      %p162 = scmp.ne.s32.totalorder %s151, %s152
      %p163 = scmp.eq.s32.totalorder %s27, 0
      %p164 = por %p162, %p163
      %p165 = scmp.ne.s32.totalorder %s151, %s152
      %p166 = scmp.eq.s32.totalorder %s28, 7
      %p167 = por %p165, %p166
      %p169 = scmp.ne.s32.totalorder %s152, %s168
      %p170 = scmp.eq.s32.totalorder %s28, 0
      %p171 = por %p169, %p170
      %s172 = ssub.s32 %s30, %s37
      %p173 = scmp.eq.s32.totalorder %s172, 0
      %s175 = sadd.s32 %s174, 1
      %s176 = scalar_select %p173, %s174, %s175
      %p179 = pneg %p173
      %p180 = scmp.eq.s32.totalorder %s22, 7
      %p181 = por %p179, %p180
      %p182 = scmp.ne.s32.totalorder %s174, %s177
      %p183 = scmp.eq.s32.totalorder %s22, 0
      %p184 = por %p182, %p183
      %p185 = scmp.ne.s32.totalorder %s174, %s177
      %p186 = scmp.eq.s32.totalorder %s27, 7
      %p187 = por %p185, %p186
      %p188 = scmp.ne.s32.totalorder %s177, %s178
      %p189 = scmp.eq.s32.totalorder %s27, 0
      %p190 = por %p188, %p189
      %p191 = scmp.ne.s32.totalorder %s177, %s178
      %p192 = scmp.eq.s32.totalorder %s28, 7
      %p193 = por %p191, %p192
      %p195 = scmp.ne.s32.totalorder %s178, %s194
      %p196 = scmp.eq.s32.totalorder %s28, 0
      %p197 = por %p195, %p196
      %s198 = ssub.s32 %s30, %s37
      %p199 = scmp.eq.s32.totalorder %s198, 0
      %s201 = sadd.s32 %s200, 1
      %s202 = scalar_select %p199, %s200, %s201
      %p205 = pneg %p199
      %p206 = scmp.eq.s32.totalorder %s22, 7
      %p207 = por %p205, %p206
      %p208 = scmp.ne.s32.totalorder %s200, %s203
      %p209 = scmp.eq.s32.totalorder %s22, 0
      %p210 = por %p208, %p209
      %p211 = scmp.ne.s32.totalorder %s200, %s203
      %p212 = scmp.eq.s32.totalorder %s27, 7
      %p213 = por %p211, %p212
      %p214 = scmp.ne.s32.totalorder %s203, %s204
      %p215 = scmp.eq.s32.totalorder %s27, 0
      %p216 = por %p214, %p215
      %p217 = scmp.ne.s32.totalorder %s203, %s204
      %p218 = scmp.eq.s32.totalorder %s28, 7
      %p219 = por %p217, %p218
      %p221 = scmp.ne.s32.totalorder %s204, %s220
      %p222 = scmp.eq.s32.totalorder %s28, 0
      %p223 = por %p221, %p222
      %s224 = ssub.s32 %s30, %s37
      %p225 = scmp.eq.s32.totalorder %s224, 0
      %s227 = sadd.s32 %s226, 1
      %s228 = scalar_select %p225, %s226, %s227
      %p231 = pneg %p225
      %p232 = scmp.eq.s32.totalorder %s22, 7
      %p233 = por %p231, %p232
      %p234 = scmp.ne.s32.totalorder %s226, %s229
      %p235 = scmp.eq.s32.totalorder %s22, 0
      %p236 = por %p234, %p235
      %p237 = scmp.ne.s32.totalorder %s226, %s229
      %p238 = scmp.eq.s32.totalorder %s27, 7
      %p239 = por %p237, %p238
      %p240 = scmp.ne.s32.totalorder %s229, %s230
      %p241 = scmp.eq.s32.totalorder %s27, 0
      %p242 = por %p240, %p241
      %p243 = scmp.ne.s32.totalorder %s229, %s230
      %p244 = scmp.eq.s32.totalorder %s28, 7
      %p245 = por %p243, %p244
      %p247 = scmp.ne.s32.totalorder %s230, %s246
      %p248 = scmp.eq.s32.totalorder %s28, 0
      %p249 = por %p247, %p248
      %s250 = ssub.s32 %s30, %s37
      %p251 = scmp.eq.s32.totalorder %s250, 0
      %s253 = sadd.s32 %s252, 1
      %s254 = scalar_select %p251, %s252, %s253
      %p257 = pneg %p251
      %p258 = scmp.eq.s32.totalorder %s22, 7
      %p259 = por %p257, %p258
      %p260 = scmp.ne.s32.totalorder %s252, %s255
      %p261 = scmp.eq.s32.totalorder %s22, 0
      %p262 = por %p260, %p261
      %p263 = scmp.ne.s32.totalorder %s252, %s255
      %p264 = scmp.eq.s32.totalorder %s27, 7
      %p265 = por %p263, %p264
      %p266 = scmp.ne.s32.totalorder %s255, %s256
      %p267 = scmp.eq.s32.totalorder %s27, 0
      %p268 = por %p266, %p267
      %p269 = scmp.ne.s32.totalorder %s255, %s256
      %p270 = scmp.eq.s32.totalorder %s28, 7
      %p271 = por %p269, %p270
      %p273 = scmp.ne.s32.totalorder %s256, %s272
      %p274 = scmp.eq.s32.totalorder %s28, 0
      %p275 = por %p273, %p274
      %s276 = ssub.s32 %s30, %s37
      %p277 = scmp.eq.s32.totalorder %s276, 0
      %s279 = sadd.s32 %s278, 1
      %s280 = scalar_select %p277, %s278, %s279
      %p283 = pneg %p277
      %p284 = scmp.eq.s32.totalorder %s22, 7
      %p285 = por %p283, %p284
      %p286 = scmp.ne.s32.totalorder %s278, %s281
      %p287 = scmp.eq.s32.totalorder %s22, 0
      %p288 = por %p286, %p287
      %p289 = scmp.ne.s32.totalorder %s278, %s281
      %p290 = scmp.eq.s32.totalorder %s27, 7
      %p291 = por %p289, %p290
      %p292 = scmp.ne.s32.totalorder %s281, %s282
      %p293 = scmp.eq.s32.totalorder %s27, 0
      %p294 = por %p292, %p293
      %p295 = scmp.ne.s32.totalorder %s281, %s282
      %p296 = scmp.eq.s32.totalorder %s28, 7
      %p297 = por %p295, %p296
      %p299 = scmp.ne.s32.totalorder %s282, %s298
      %p300 = scmp.eq.s32.totalorder %s28, 0
      %p301 = por %p299, %p300
      %s303 = sadd.s32 %s302, 1
      %p306 = scmp.eq.s32.totalorder %s22, 7
      %p307 = scmp.ne.s32.totalorder %s302, %s304
      %p308 = scmp.eq.s32.totalorder %s22, 0
      %p309 = por %p307, %p308
      %p310 = scmp.ne.s32.totalorder %s302, %s304
      %p311 = scmp.eq.s32.totalorder %s27, 7
      %p312 = por %p310, %p311
      %p313 = scmp.ne.s32.totalorder %s304, %s305
      %p314 = scmp.eq.s32.totalorder %s27, 0
      %p315 = por %p313, %p314
      %p316 = scmp.ne.s32.totalorder %s304, %s305
      %p317 = scmp.eq.s32.totalorder %s28, 7
      %p318 = por %p316, %p317
      %p320 = scmp.ne.s32.totalorder %s305, %s319
      %p321 = scmp.eq.s32.totalorder %s28, 0
      %p322 = por %p320, %p321
      %s324 = sadd.s32 %s323, 1
      %p327 = scmp.eq.s32.totalorder %s22, 7
      %p328 = scmp.ne.s32.totalorder %s323, %s325
      %p329 = scmp.eq.s32.totalorder %s22, 0
      %p330 = por %p328, %p329
      %p331 = scmp.ne.s32.totalorder %s323, %s325
      %p332 = scmp.eq.s32.totalorder %s27, 7
      %p333 = por %p331, %p332
      %p334 = scmp.ne.s32.totalorder %s325, %s326
      %p335 = scmp.eq.s32.totalorder %s27, 0
      %p336 = por %p334, %p335
      %p337 = scmp.ne.s32.totalorder %s325, %s326
      %p338 = scmp.eq.s32.totalorder %s28, 7
      %p339 = por %p337, %p338
      %p341 = scmp.ne.s32.totalorder %s326, %s340
      %p342 = scmp.eq.s32.totalorder %s28, 0
      %p343 = por %p341, %p342
      %s345 = sadd.s32 %s344, 1
      %p348 = scmp.eq.s32.totalorder %s22, 7
      %p349 = scmp.ne.s32.totalorder %s344, %s346
      %p350 = scmp.eq.s32.totalorder %s22, 0
      %p351 = por %p349, %p350
      %p352 = scmp.ne.s32.totalorder %s344, %s346
      %p353 = scmp.eq.s32.totalorder %s27, 7
      %p354 = por %p352, %p353
      %p355 = scmp.ne.s32.totalorder %s346, %s347
      %p356 = scmp.eq.s32.totalorder %s27, 0
      %p357 = por %p355, %p356
      %p358 = scmp.ne.s32.totalorder %s346, %s347
      %p359 = scmp.eq.s32.totalorder %s28, 7
      %p360 = por %p358, %p359
      %p362 = scmp.ne.s32.totalorder %s347, %s361
      %p363 = scmp.eq.s32.totalorder %s28, 0
      %p364 = por %p362, %p363
      %s365 = ssub.s32 %s29, %s41
      %p366 = scmp.eq.s32.totalorder %s365, 0
      %s368 = sadd.s32 %s367, 1
      %s369 = scalar_select %p366, %s367, %s368
      %p372 = pneg %p366
      %p373 = scmp.eq.s32.totalorder %s22, 7
      %p374 = por %p372, %p373
      %p375 = scmp.ne.s32.totalorder %s367, %s370
      %p376 = scmp.eq.s32.totalorder %s22, 0
      %p377 = por %p375, %p376
      %p378 = scmp.ne.s32.totalorder %s367, %s370
      %p379 = scmp.eq.s32.totalorder %s27, 7
      %p380 = por %p378, %p379
      %p381 = scmp.ne.s32.totalorder %s370, %s371
      %p382 = scmp.eq.s32.totalorder %s27, 0
      %p383 = por %p381, %p382
      %p384 = scmp.ne.s32.totalorder %s370, %s371
      %p385 = scmp.eq.s32.totalorder %s28, 7
      %p386 = por %p384, %p385
      %p388 = scmp.ne.s32.totalorder %s371, %s387
      %p389 = scmp.eq.s32.totalorder %s28, 0
      %p390 = por %p388, %p389
      %p391 = scmp.le.s32.totalorder 1, %s22
      %p392 = scmp.lt.s32.totalorder %s22, 9
      %p393 = pnand %p391, %p392
      %p394 = pneg %p393
      // Predicated region
      $region9: #{tpu_custom_call.1} parent=5 // pred_check
        _
      $region10: #{tpu_custom_call.1} parent=5 // pred_check_branch
        %396 = sbr.rel (%p393) target = $region12
      $region11: #{tpu_custom_call.1} parent=5 // pred_region
        %s397 = ssub.s32 %s22, 1
        // Predicated region
        $region13: #{tpu_custom_call.1} parent=11 // pred_check
          %p398 = pneg %p315
        $region14: #{tpu_custom_call.1} parent=11 // pred_check_branch
          %400 = sbr.rel (%p398) target = $region16
        $region15: #{tpu_custom_call.1} parent=11 // pred_region
          _
        $region16: #{tpu_custom_call.1} parent=11 // pred_fallthru
          _
        // Predicated region
        $region17: #{tpu_custom_call.1} parent=11 // pred_check
          %p401 = pneg %p336
        $region18: #{tpu_custom_call.1} parent=11 // pred_check_branch
          %403 = sbr.rel (%p401) target = $region20
        $region19: #{tpu_custom_call.1} parent=11 // pred_region
          _
        $region20: #{tpu_custom_call.1} parent=11 // pred_fallthru
          _
        // Predicated region
        $region21: #{tpu_custom_call.1} parent=11 // pred_check
          %p404 = pneg %p357
        $region22: #{tpu_custom_call.1} parent=11 // pred_check_branch
          %406 = sbr.rel (%p404) target = $region24
        $region23: #{tpu_custom_call.1} parent=11 // pred_region
          _
        $region24: #{tpu_custom_call.1} parent=11 // pred_fallthru
          _
      $region12: #{tpu_custom_call.1} parent=5 // pred_fallthru
        _
      %p407 = scmp.lt.s32.totalorder %s22, 8
      // Predicated region
      $region25: #{tpu_custom_call.1} parent=5 // pred_check
        %p408 = pneg %p407
      $region26: #{tpu_custom_call.1} parent=5 // pred_check_branch
        %410 = sbr.rel (%p408) target = $region28
      $region27: #{tpu_custom_call.1} parent=5 // pred_region
        // Predicated region
        $region29: #{tpu_custom_call.1} parent=27 // pred_check
          %p411 = pneg %p54
        $region30: #{tpu_custom_call.1} parent=27 // pred_check_branch
          %413 = sbr.rel (%p411) target = $region32
        $region31: #{tpu_custom_call.1} parent=27 // pred_region
          %p414 = scmp.lt.s32.totalorder %s29, 1
          %s415 = scalar_select %p414, %s29, 1
          %s416 = smul.addr %s415, 8
          %s417 = scalar_lea.vmem %s0, %s416
        $region32: #{tpu_custom_call.1} parent=27 // pred_fallthru
          _
        // Predicated region
        $region33: #{tpu_custom_call.1} parent=27 // pred_check
          %p418 = pneg %p80
        $region34: #{tpu_custom_call.1} parent=27 // pred_check_branch
          %420 = sbr.rel (%p418) target = $region36
        $region35: #{tpu_custom_call.1} parent=27 // pred_region
          %p421 = scmp.lt.s32.totalorder %s29, 1
          %s422 = scalar_select %p421, %s29, 1
          %s423 = smul.addr %s422, 8
          %s424 = scalar_lea.vmem %s1, %s423
        $region36: #{tpu_custom_call.1} parent=27 // pred_fallthru
          _
        // Predicated region
        $region37: #{tpu_custom_call.1} parent=27 // pred_check
          %p425 = pneg %p106
        $region38: #{tpu_custom_call.1} parent=27 // pred_check_branch
          %427 = sbr.rel (%p425) target = $region40
        $region39: #{tpu_custom_call.1} parent=27 // pred_region
          %p428 = scmp.lt.s32.totalorder %s29, 1
          %s429 = scalar_select %p428, %s29, 1
          %s430 = smul.addr %s429, 8
          %s431 = scalar_lea.vmem %s2, %s430
        $region40: #{tpu_custom_call.1} parent=27 // pred_fallthru
          _
        // Predicated region
        $region41: #{tpu_custom_call.1} parent=27 // pred_check
          %p432 = pneg %p132
        $region42: #{tpu_custom_call.1} parent=27 // pred_check_branch
          %434 = sbr.rel (%p432) target = $region44
        $region43: #{tpu_custom_call.1} parent=27 // pred_region
          %p435 = scmp.lt.s32.totalorder %s30, 3
          %s436 = scalar_select %p435, %s30, 3
          %s437 = smul.addr %s436, 16
          %s438 = smul.addr %s437, 8
          %s439 = scalar_lea.vmem %s3, %s438
        $region44: #{tpu_custom_call.1} parent=27 // pred_fallthru
          _
        // Predicated region
        $region45: #{tpu_custom_call.1} parent=27 // pred_check
          %p440 = pneg %p158
        $region46: #{tpu_custom_call.1} parent=27 // pred_check_branch
          %442 = sbr.rel (%p440) target = $region48
        $region47: #{tpu_custom_call.1} parent=27 // pred_region
          %p443 = scmp.lt.s32.totalorder %s30, 3
          %s444 = scalar_select %p443, %s30, 3
          %s445 = scalar_lea.vmem %s4, %s444
        $region48: #{tpu_custom_call.1} parent=27 // pred_fallthru
          _
        // Predicated region
        $region49: #{tpu_custom_call.1} parent=27 // pred_check
          %p446 = pneg %p184
        $region50: #{tpu_custom_call.1} parent=27 // pred_check_branch
          %448 = sbr.rel (%p446) target = $region52
        $region51: #{tpu_custom_call.1} parent=27 // pred_region
          %p449 = scmp.lt.s32.totalorder %s30, 3
          %s450 = scalar_select %p449, %s30, 3
          %s451 = smul.addr %s450, 16
          %s452 = smul.addr %s451, 8
          %s453 = scalar_lea.vmem %s5, %s452
        $region52: #{tpu_custom_call.1} parent=27 // pred_fallthru
          _
        // Predicated region
        $region53: #{tpu_custom_call.1} parent=27 // pred_check
          %p454 = pneg %p210
        $region54: #{tpu_custom_call.1} parent=27 // pred_check_branch
          %456 = sbr.rel (%p454) target = $region56
        $region55: #{tpu_custom_call.1} parent=27 // pred_region
          %p457 = scmp.lt.s32.totalorder %s30, 3
          %s458 = scalar_select %p457, %s30, 3
          %s459 = scalar_lea.vmem %s6, %s458
        $region56: #{tpu_custom_call.1} parent=27 // pred_fallthru
          _
        // Predicated region
        $region57: #{tpu_custom_call.1} parent=27 // pred_check
          %p460 = pneg %p236
        $region58: #{tpu_custom_call.1} parent=27 // pred_check_branch
          %462 = sbr.rel (%p460) target = $region60
        $region59: #{tpu_custom_call.1} parent=27 // pred_region
          %p463 = scmp.lt.s32.totalorder %s30, 3
          %s464 = scalar_select %p463, %s30, 3
          %s465 = smul.addr %s464, 16
          %s466 = smul.addr %s465, 8
          %s467 = scalar_lea.vmem %s7, %s466
        $region60: #{tpu_custom_call.1} parent=27 // pred_fallthru
          _
        // Predicated region
        $region61: #{tpu_custom_call.1} parent=27 // pred_check
          %p468 = pneg %p262
        $region62: #{tpu_custom_call.1} parent=27 // pred_check_branch
          %470 = sbr.rel (%p468) target = $region64
        $region63: #{tpu_custom_call.1} parent=27 // pred_region
          %p471 = scmp.lt.s32.totalorder %s30, 3
          %s472 = scalar_select %p471, %s30, 3
          %s473 = scalar_lea.vmem %s8, %s472
        $region64: #{tpu_custom_call.1} parent=27 // pred_fallthru
          _
        // Predicated region
        $region65: #{tpu_custom_call.1} parent=27 // pred_check
          %p474 = pneg %p288
        $region66: #{tpu_custom_call.1} parent=27 // pred_check_branch
          %476 = sbr.rel (%p474) target = $region68
        $region67: #{tpu_custom_call.1} parent=27 // pred_region
          %p477 = scmp.lt.s32.totalorder %s30, 3
          %s478 = scalar_select %p477, %s30, 3
          %s479 = smul.addr %s478, 4
          %s480 = smul.addr %s479, 8
          %s481 = scalar_lea.vmem %s9, %s480
        $region68: #{tpu_custom_call.1} parent=27 // pred_fallthru
          _
      $region28: #{tpu_custom_call.1} parent=5 // pred_fallthru
        _
      %p482 = scmp.le.s32.totalorder 1, %s22
      %p483 = scmp.lt.s32.totalorder %s22, 9
      %p484 = pnand %p482, %p483
      %p485 = pneg %p484
      // Predicated region
      $region69: #{tpu_custom_call.1} parent=5 // pred_check
        _
      $region70: #{tpu_custom_call.1} parent=5 // pred_check_branch
        %487 = sbr.rel (%p484) target = $region72
      $region71: #{tpu_custom_call.1} parent=5 // pred_region
        %s488 = ssub.s32 %s22, 1
        %p489 = scmp.lt.s32.totalorder %s31, 1
        %s490 = scalar_select %p489, %s31, 1
        %s491 = smul.addr %s490, 8
        %s492 = scalar_lea.vmem %s0, %s491
        %p493 = pneg %p60
        %p494 = pneg %p57
        %p495 = scmp.lt.s32.totalorder %s31, 1
        %s496 = scalar_select %p495, %s31, 1
        %s497 = smul.addr %s496, 8
        %s498 = scalar_lea.vmem %s1, %s497
        %p499 = pneg %p86
        %p500 = pneg %p83
        %p501 = scmp.lt.s32.totalorder %s31, 1
        %s502 = scalar_select %p501, %s31, 1
        %s503 = smul.addr %s502, 8
        %s504 = scalar_lea.vmem %s2, %s503
        %p505 = pneg %p112
        %p506 = pneg %p109
        %p507 = scmp.lt.s32.totalorder %s32, 3
        %s508 = scalar_select %p507, %s32, 3
        %s509 = smul.addr %s508, 16
        %s510 = smul.addr %s509, 8
        %s511 = scalar_lea.vmem %s3, %s510
        %p512 = pneg %p138
        %p513 = pneg %p135
        %p514 = scmp.lt.s32.totalorder %s32, 3
        %s515 = scalar_select %p514, %s32, 3
        %s516 = scalar_lea.vmem %s4, %s515
        %p517 = pneg %p164
        %p518 = pneg %p161
        %p519 = scmp.lt.s32.totalorder %s32, 3
        %s520 = scalar_select %p519, %s32, 3
        %s521 = smul.addr %s520, 16
        %s522 = smul.addr %s521, 8
        %s523 = scalar_lea.vmem %s5, %s522
        %p524 = pneg %p190
        %p525 = pneg %p187
        %p526 = scmp.lt.s32.totalorder %s32, 3
        %s527 = scalar_select %p526, %s32, 3
        %s528 = scalar_lea.vmem %s6, %s527
        %p529 = pneg %p216
        %p530 = pneg %p213
        %p531 = scmp.lt.s32.totalorder %s32, 3
        %s532 = scalar_select %p531, %s32, 3
        %s533 = smul.addr %s532, 16
        %s534 = smul.addr %s533, 8
        %s535 = scalar_lea.vmem %s7, %s534
        %p536 = pneg %p242
        %p537 = pneg %p239
        %p538 = scmp.lt.s32.totalorder %s32, 3
        %s539 = scalar_select %p538, %s32, 3
        %s540 = scalar_lea.vmem %s8, %s539
        %p541 = pneg %p268
        %p542 = pneg %p265
        %p543 = scmp.lt.s32.totalorder %s32, 3
        %s544 = scalar_select %p543, %s32, 3
        %s545 = smul.addr %s544, 4
        %s546 = smul.addr %s545, 8
        %s547 = scalar_lea.vmem %s9, %s546
        %p548 = pneg %p294
        %p549 = pneg %p291
        %p550 = pneg %p315
        %p551 = pneg %p312
        %p552 = pneg %p336
        %p553 = pneg %p333
        %p554 = pneg %p357
        %p555 = pneg %p354
        %p556 = pneg %p383
        %p557 = pneg %p380
        %s558 = sand.u32 %s370, 1
        %s559 = scalar_lea.sflag [#allocation4], %s558
        %s560 = sand.u32 %s370, 1
        %s561 = smul.addr %s560, 8
        %s562 = scalar_lea.vmem [#allocation3], %s561
        %p563 = scmp.lt.s32.totalorder %s31, 1
        %s564 = scalar_select %p563, %s31, 1
        %s565 = smul.addr %s564, 8
        %s566 = scalar_lea.vmem %s0, %s565
        %p567 = scmp.lt.s32.totalorder %s31, 1
        %s568 = scalar_select %p567, %s31, 1
        %s569 = smul.addr %s568, 8
        %s570 = scalar_lea.vmem %s1, %s569
        %p571 = scmp.lt.s32.totalorder %s31, 1
        %s572 = scalar_select %p571, %s31, 1
        %s573 = smul.addr %s572, 8
        %s574 = scalar_lea.vmem %s2, %s573
        %p575 = scmp.lt.s32.totalorder %s32, 3
        %s576 = scalar_select %p575, %s32, 3
        %s577 = smul.addr %s576, 16
        %s578 = smul.addr %s577, 8
        %s579 = scalar_lea.vmem %s3, %s578
        %p580 = scmp.lt.s32.totalorder %s32, 3
        %s581 = scalar_select %p580, %s32, 3
        %s582 = scalar_lea.vmem %s4, %s581
        %p583 = scmp.lt.s32.totalorder %s32, 3
        %s584 = scalar_select %p583, %s32, 3
        %s585 = smul.addr %s584, 16
        %s586 = smul.addr %s585, 8
        %s587 = scalar_lea.vmem %s5, %s586
        %p588 = scmp.lt.s32.totalorder %s32, 3
        %s589 = scalar_select %p588, %s32, 3
        %s590 = scalar_lea.vmem %s6, %s589
        %p591 = scmp.lt.s32.totalorder %s32, 3
        %s592 = scalar_select %p591, %s32, 3
        %s593 = smul.addr %s592, 16
        %s594 = smul.addr %s593, 8
        %s595 = scalar_lea.vmem %s7, %s594
        %p596 = scmp.lt.s32.totalorder %s32, 3
        %s597 = scalar_select %p596, %s32, 3
        %s598 = scalar_lea.vmem %s8, %s597
        %p599 = scmp.lt.s32.totalorder %s32, 3
        %s600 = scalar_select %p599, %s32, 3
        %s601 = smul.addr %s600, 4
        %s602 = smul.addr %s601, 8
        %s603 = scalar_lea.vmem %s9, %s602
        %p604 = scmp.eq.s32.totalorder %s32, 0
        // Predicated region
        $region73: #{tpu_custom_call.1} parent=71 // pred_check
          %p605 = pneg %p604
        $region74: #{tpu_custom_call.1} parent=71 // pred_check_branch
          %607 = sbr.rel (%p605) target = $region76
        $region75: #{tpu_custom_call.1} parent=71 // pred_region
          %608 = vst [vmem:[#allocation2] sm:$0xff] 0.0
        $region76: #{tpu_custom_call.1} parent=71 // pred_fallthru
          _
        %v609 = vld [vmem:[%s566] sm:$0xff]
        %v610 = vld [vmem:[%s570] sm:$0xff]
        %v611 = vld [vmem:[%s574] sm:$0xff]
        %v612 = vld [vmem:[%s579] sm:$0xff]
        %v613 = vld [vmem:[%s579 + $0x8] sm:$0xff]
        %v614 = vld [vmem:[%s579 + $0x10] sm:$0xff]
        %v615 = vld [vmem:[%s579 + $0x18] sm:$0xff]
        %v616 = vld [vmem:[%s579 + $0x20] sm:$0xff]
        %v617 = vld [vmem:[%s579 + $0x28] sm:$0xff]
        %v618 = vld [vmem:[%s579 + $0x30] sm:$0xff]
        %v619 = vld [vmem:[%s579 + $0x38] sm:$0xff]
        %v620 = vld [vmem:[%s579 + $0x40] sm:$0xff]
        %v621 = vld [vmem:[%s579 + $0x48] sm:$0xff]
        %v622 = vld [vmem:[%s579 + $0x50] sm:$0xff]
        %v623 = vld [vmem:[%s579 + $0x58] sm:$0xff]
        %v624 = vld [vmem:[%s579 + $0x60] sm:$0xff]
        %v625 = vld [vmem:[%s579 + $0x68] sm:$0xff]
        %v626 = vld [vmem:[%s579 + $0x70] sm:$0xff]
        %v627 = vld [vmem:[%s579 + $0x78] sm:$0xff]
        %v628 = vld [vmem:[%s582] sm:$0x1]
        %v630 = vperm.slane %v628, 0
        %v632 = vand.u32 %v627, 4294901760
        %633 = vmatpush.msra.mxu0 %v632
        %v634 = vand.u32 %v626, 4294901760
        %635 = vmatpush.msra.mxu0 %v634
        %v636 = vand.u32 %v625, 4294901760
        %637 = vmatpush.msra.mxu0 %v636
        %v638 = vand.u32 %v624, 4294901760
        %639 = vmatpush.msra.mxu0 %v638
        %v640 = vand.u32 %v623, 4294901760
        %641 = vmatpush.msra.mxu0 %v640
        %v642 = vand.u32 %v622, 4294901760
        %643 = vmatpush.msra.mxu0 %v642
        %v644 = vand.u32 %v621, 4294901760
        %645 = vmatpush.msra.mxu0 %v644
        %v646 = vand.u32 %v620, 4294901760
        %647 = vmatpush.msra.mxu0 %v646
        %v648 = vand.u32 %v619, 4294901760
        %649 = vmatpush.msra.mxu0 %v648
        %v650 = vand.u32 %v618, 4294901760
        %651 = vmatpush.msra.mxu0 %v650
        %v652 = vand.u32 %v617, 4294901760
        %653 = vmatpush.msra.mxu0 %v652
        %v654 = vand.u32 %v616, 4294901760
        %655 = vmatpush.msra.mxu0 %v654
        %v656 = vand.u32 %v615, 4294901760
        %657 = vmatpush.msra.mxu0 %v656
        %v658 = vand.u32 %v614, 4294901760
        %659 = vmatpush.msra.mxu0 %v658
        %v660 = vand.u32 %v613, 4294901760
        %661 = vmatpush.msra.mxu0 %v660
        %v662 = vand.u32 %v612, 4294901760
        %663 = vmatpush.msra.mxu0 %v662
        %v664 = vand.u32 %v609, 4294901760
        %v665 = vsub.f32 %v609, %v664
        %v666 = vand.u32 %v665, 4294901760
        %v667 = vsub.f32 %v665, %v666
        %v668 = vand.u32 %v667, 4294901760
        %669 = vmatmul.f32.gmra.mxu0 %v668
        %v670 = vpop.f32.mrf.mxu0
        %v671 = vadd.f32 %v630, %v670
        %672 = vdwg.mxu0
        %v673 = vand.u32 %v627, 4294901760
        %v674 = vsub.f32 %v627, %v673
        %v675 = vand.u32 %v674, 4294901760
        %v676 = vsub.f32 %v674, %v675
        %v677 = vand.u32 %v676, 4294901760
        %678 = vmatpush.msra.mxu0 %v677
        %v679 = vand.u32 %v626, 4294901760
        %v680 = vsub.f32 %v626, %v679
        %v681 = vand.u32 %v680, 4294901760
        %v682 = vsub.f32 %v680, %v681
        %v683 = vand.u32 %v682, 4294901760
        %684 = vmatpush.msra.mxu0 %v683
        %v685 = vand.u32 %v625, 4294901760
        %v686 = vsub.f32 %v625, %v685
        %v687 = vand.u32 %v686, 4294901760
        %v688 = vsub.f32 %v686, %v687
        %v689 = vand.u32 %v688, 4294901760
        %690 = vmatpush.msra.mxu0 %v689
        %v691 = vand.u32 %v624, 4294901760
        %v692 = vsub.f32 %v624, %v691
        %v693 = vand.u32 %v692, 4294901760
        %v694 = vsub.f32 %v692, %v693
        %v695 = vand.u32 %v694, 4294901760
        %696 = vmatpush.msra.mxu0 %v695
        %v697 = vand.u32 %v623, 4294901760
        %v698 = vsub.f32 %v623, %v697
        %v699 = vand.u32 %v698, 4294901760
        %v700 = vsub.f32 %v698, %v699
        %v701 = vand.u32 %v700, 4294901760
        %702 = vmatpush.msra.mxu0 %v701
        %v703 = vand.u32 %v622, 4294901760
        %v704 = vsub.f32 %v622, %v703
        %v705 = vand.u32 %v704, 4294901760
        %v706 = vsub.f32 %v704, %v705
        %v707 = vand.u32 %v706, 4294901760
        %708 = vmatpush.msra.mxu0 %v707
        %v709 = vand.u32 %v621, 4294901760
        %v710 = vsub.f32 %v621, %v709
        %v711 = vand.u32 %v710, 4294901760
        %v712 = vsub.f32 %v710, %v711
        %v713 = vand.u32 %v712, 4294901760
        %714 = vmatpush.msra.mxu0 %v713
        %v715 = vand.u32 %v620, 4294901760
        %v716 = vsub.f32 %v620, %v715
        %v717 = vand.u32 %v716, 4294901760
        %v718 = vsub.f32 %v716, %v717
        %v719 = vand.u32 %v718, 4294901760
        %720 = vmatpush.msra.mxu0 %v719
        %v721 = vand.u32 %v619, 4294901760
        %v722 = vsub.f32 %v619, %v721
        %v723 = vand.u32 %v722, 4294901760
        %v724 = vsub.f32 %v722, %v723
        %v725 = vand.u32 %v724, 4294901760
        %726 = vmatpush.msra.mxu0 %v725
        %v727 = vand.u32 %v618, 4294901760
        %v728 = vsub.f32 %v618, %v727
        %v729 = vand.u32 %v728, 4294901760
        %v730 = vsub.f32 %v728, %v729
        %v731 = vand.u32 %v730, 4294901760
        %732 = vmatpush.msra.mxu0 %v731
        %v733 = vand.u32 %v617, 4294901760
        %v734 = vsub.f32 %v617, %v733
        %v735 = vand.u32 %v734, 4294901760
        %v736 = vsub.f32 %v734, %v735
        %v737 = vand.u32 %v736, 4294901760
        %738 = vmatpush.msra.mxu0 %v737
        %v739 = vand.u32 %v616, 4294901760
        %v740 = vsub.f32 %v616, %v739
        %v741 = vand.u32 %v740, 4294901760
        %v742 = vsub.f32 %v740, %v741
        %v743 = vand.u32 %v742, 4294901760
        %744 = vmatpush.msra.mxu0 %v743
        %v745 = vand.u32 %v615, 4294901760
        %v746 = vsub.f32 %v615, %v745
        %v747 = vand.u32 %v746, 4294901760
        %v748 = vsub.f32 %v746, %v747
        %v749 = vand.u32 %v748, 4294901760
        %750 = vmatpush.msra.mxu0 %v749
        %v751 = vand.u32 %v614, 4294901760
        %v752 = vsub.f32 %v614, %v751
        %v753 = vand.u32 %v752, 4294901760
        %v754 = vsub.f32 %v752, %v753
        %v755 = vand.u32 %v754, 4294901760
        %756 = vmatpush.msra.mxu0 %v755
        %v757 = vand.u32 %v613, 4294901760
        %v758 = vsub.f32 %v613, %v757
        %v759 = vand.u32 %v758, 4294901760
        %v760 = vsub.f32 %v758, %v759
        %v761 = vand.u32 %v760, 4294901760
        %762 = vmatpush.msra.mxu0 %v761
        %v763 = vand.u32 %v612, 4294901760
        %v764 = vsub.f32 %v612, %v763
        %v765 = vand.u32 %v764, 4294901760
        %v766 = vsub.f32 %v764, %v765
        %v767 = vand.u32 %v766, 4294901760
        %768 = vmatpush.msra.mxu0 %v767
        %v769 = vand.u32 %v609, 4294901760
        %770 = vmatmul.f32.gmra.mxu0 %v769
        %v771 = vpop.f32.mrf.mxu0
        %v772 = vadd.f32 %v671, %v771
        %773 = vdwg.mxu0
        %v774 = vand.u32 %v627, 4294901760
        %v775 = vsub.f32 %v627, %v774
        %776 = vmatpush.msra.mxu0 %v775
        %v777 = vand.u32 %v626, 4294901760
        %v778 = vsub.f32 %v626, %v777
        %779 = vmatpush.msra.mxu0 %v778
        %v780 = vand.u32 %v625, 4294901760
        %v781 = vsub.f32 %v625, %v780
        %782 = vmatpush.msra.mxu0 %v781
        %v783 = vand.u32 %v624, 4294901760
        %v784 = vsub.f32 %v624, %v783
        %785 = vmatpush.msra.mxu0 %v784
        %v786 = vand.u32 %v623, 4294901760
        %v787 = vsub.f32 %v623, %v786
        %788 = vmatpush.msra.mxu0 %v787
        %v789 = vand.u32 %v622, 4294901760
        %v790 = vsub.f32 %v622, %v789
        %791 = vmatpush.msra.mxu0 %v790
        %v792 = vand.u32 %v621, 4294901760
        %v793 = vsub.f32 %v621, %v792
        %794 = vmatpush.msra.mxu0 %v793
        %v795 = vand.u32 %v620, 4294901760
        %v796 = vsub.f32 %v620, %v795
        %797 = vmatpush.msra.mxu0 %v796
        %v798 = vand.u32 %v619, 4294901760
        %v799 = vsub.f32 %v619, %v798
        %800 = vmatpush.msra.mxu0 %v799
        %v801 = vand.u32 %v618, 4294901760
        %v802 = vsub.f32 %v618, %v801
        %803 = vmatpush.msra.mxu0 %v802
        %v804 = vand.u32 %v617, 4294901760
        %v805 = vsub.f32 %v617, %v804
        %806 = vmatpush.msra.mxu0 %v805
        %v807 = vand.u32 %v616, 4294901760
        %v808 = vsub.f32 %v616, %v807
        %809 = vmatpush.msra.mxu0 %v808
        %v810 = vand.u32 %v615, 4294901760
        %v811 = vsub.f32 %v615, %v810
        %812 = vmatpush.msra.mxu0 %v811
        %v813 = vand.u32 %v614, 4294901760
        %v814 = vsub.f32 %v614, %v813
        %815 = vmatpush.msra.mxu0 %v814
        %v816 = vand.u32 %v613, 4294901760
        %v817 = vsub.f32 %v613, %v816
        %818 = vmatpush.msra.mxu0 %v817
        %v819 = vand.u32 %v612, 4294901760
        %v820 = vsub.f32 %v612, %v819
        %821 = vmatpush.msra.mxu0 %v820
        %v822 = vand.u32 %v609, 4294901760
        %v823 = vsub.f32 %v609, %v822
        %824 = vmatmul.f32.gmra.mxu0 %v823
        %v825 = vpop.f32.mrf.mxu0
        %v826 = vadd.f32 %v772, %v825
        %827 = vdwg.mxu0
        %v828 = vand.u32 %v627, 4294901760
        %829 = vmatpush.msra.mxu0 %v828
        %v830 = vand.u32 %v626, 4294901760
        %831 = vmatpush.msra.mxu0 %v830
        %v832 = vand.u32 %v625, 4294901760
        %833 = vmatpush.msra.mxu0 %v832
        %v834 = vand.u32 %v624, 4294901760
        %835 = vmatpush.msra.mxu0 %v834
        %v836 = vand.u32 %v623, 4294901760
        %837 = vmatpush.msra.mxu0 %v836
        %v838 = vand.u32 %v622, 4294901760
        %839 = vmatpush.msra.mxu0 %v838
        %v840 = vand.u32 %v621, 4294901760
        %841 = vmatpush.msra.mxu0 %v840
        %v842 = vand.u32 %v620, 4294901760
        %843 = vmatpush.msra.mxu0 %v842
        %v844 = vand.u32 %v619, 4294901760
        %845 = vmatpush.msra.mxu0 %v844
        %v846 = vand.u32 %v618, 4294901760
        %847 = vmatpush.msra.mxu0 %v846
        %v848 = vand.u32 %v617, 4294901760
        %849 = vmatpush.msra.mxu0 %v848
        %v850 = vand.u32 %v616, 4294901760
        %851 = vmatpush.msra.mxu0 %v850
        %v852 = vand.u32 %v615, 4294901760
        %853 = vmatpush.msra.mxu0 %v852
        %v854 = vand.u32 %v614, 4294901760
        %855 = vmatpush.msra.mxu0 %v854
        %v856 = vand.u32 %v613, 4294901760
        %857 = vmatpush.msra.mxu0 %v856
        %v858 = vand.u32 %v612, 4294901760
        %859 = vmatpush.msra.mxu0 %v858
        %v860 = vand.u32 %v609, 4294901760
        %v861 = vsub.f32 %v609, %v860
        %v862 = vand.u32 %v861, 4294901760
        %863 = vmatmul.f32.gmra.mxu0 %v862
        %v864 = vpop.f32.mrf.mxu0
        %v865 = vadd.f32 %v826, %v864
        %866 = vdwg.mxu0
        %v867 = vand.u32 %v627, 4294901760
        %v868 = vsub.f32 %v627, %v867
        %v869 = vand.u32 %v868, 4294901760
        %870 = vmatpush.msra.mxu0 %v869
        %v871 = vand.u32 %v626, 4294901760
        %v872 = vsub.f32 %v626, %v871
        %v873 = vand.u32 %v872, 4294901760
        %874 = vmatpush.msra.mxu0 %v873
        %v875 = vand.u32 %v625, 4294901760
        %v876 = vsub.f32 %v625, %v875
        %v877 = vand.u32 %v876, 4294901760
        %878 = vmatpush.msra.mxu0 %v877
        %v879 = vand.u32 %v624, 4294901760
        %v880 = vsub.f32 %v624, %v879
        %v881 = vand.u32 %v880, 4294901760
        %882 = vmatpush.msra.mxu0 %v881
        %v883 = vand.u32 %v623, 4294901760
        %v884 = vsub.f32 %v623, %v883
        %v885 = vand.u32 %v884, 4294901760
        %886 = vmatpush.msra.mxu0 %v885
        %v887 = vand.u32 %v622, 4294901760
        %v888 = vsub.f32 %v622, %v887
        %v889 = vand.u32 %v888, 4294901760
        %890 = vmatpush.msra.mxu0 %v889
        %v891 = vand.u32 %v621, 4294901760
        %v892 = vsub.f32 %v621, %v891
        %v893 = vand.u32 %v892, 4294901760
        %894 = vmatpush.msra.mxu0 %v893
        %v895 = vand.u32 %v620, 4294901760
        %v896 = vsub.f32 %v620, %v895
        %v897 = vand.u32 %v896, 4294901760
        %898 = vmatpush.msra.mxu0 %v897
        %v899 = vand.u32 %v619, 4294901760
        %v900 = vsub.f32 %v619, %v899
        %v901 = vand.u32 %v900, 4294901760
        %902 = vmatpush.msra.mxu0 %v901
        %v903 = vand.u32 %v618, 4294901760
        %v904 = vsub.f32 %v618, %v903
        %v905 = vand.u32 %v904, 4294901760
        %906 = vmatpush.msra.mxu0 %v905
        %v907 = vand.u32 %v617, 4294901760
        %v908 = vsub.f32 %v617, %v907
        %v909 = vand.u32 %v908, 4294901760
        %910 = vmatpush.msra.mxu0 %v909
        %v911 = vand.u32 %v616, 4294901760
        %v912 = vsub.f32 %v616, %v911
        %v913 = vand.u32 %v912, 4294901760
        %914 = vmatpush.msra.mxu0 %v913
        %v915 = vand.u32 %v615, 4294901760
        %v916 = vsub.f32 %v615, %v915
        %v917 = vand.u32 %v916, 4294901760
        %918 = vmatpush.msra.mxu0 %v917
        %v919 = vand.u32 %v614, 4294901760
        %v920 = vsub.f32 %v614, %v919
        %v921 = vand.u32 %v920, 4294901760
        %922 = vmatpush.msra.mxu0 %v921
        %v923 = vand.u32 %v613, 4294901760
        %v924 = vsub.f32 %v613, %v923
        %v925 = vand.u32 %v924, 4294901760
        %926 = vmatpush.msra.mxu0 %v925
        %v927 = vand.u32 %v612, 4294901760
        %v928 = vsub.f32 %v612, %v927
        %v929 = vand.u32 %v928, 4294901760
        %930 = vmatpush.msra.mxu0 %v929
        %v931 = vand.u32 %v609, 4294901760
        %932 = vmatmul.f32.gmra.mxu0 %v931
        %v933 = vpop.f32.mrf.mxu0
        %v934 = vadd.f32 %v865, %v933
        %935 = vdwg.mxu0
        %v936 = vand.u32 %v627, 4294901760
        %937 = vmatpush.msra.mxu0 %v936
        %v938 = vand.u32 %v626, 4294901760
        %939 = vmatpush.msra.mxu0 %v938
        %v940 = vand.u32 %v625, 4294901760
        %941 = vmatpush.msra.mxu0 %v940
        %v942 = vand.u32 %v624, 4294901760
        %943 = vmatpush.msra.mxu0 %v942
        %v944 = vand.u32 %v623, 4294901760
        %945 = vmatpush.msra.mxu0 %v944
        %v946 = vand.u32 %v622, 4294901760
        %947 = vmatpush.msra.mxu0 %v946
        %v948 = vand.u32 %v621, 4294901760
        %949 = vmatpush.msra.mxu0 %v948
        %v950 = vand.u32 %v620, 4294901760
        %951 = vmatpush.msra.mxu0 %v950
        %v952 = vand.u32 %v619, 4294901760
        %953 = vmatpush.msra.mxu0 %v952
        %v954 = vand.u32 %v618, 4294901760
        %955 = vmatpush.msra.mxu0 %v954
        %v956 = vand.u32 %v617, 4294901760
        %957 = vmatpush.msra.mxu0 %v956
        %v958 = vand.u32 %v616, 4294901760
        %959 = vmatpush.msra.mxu0 %v958
        %v960 = vand.u32 %v615, 4294901760
        %961 = vmatpush.msra.mxu0 %v960
        %v962 = vand.u32 %v614, 4294901760
        %963 = vmatpush.msra.mxu0 %v962
        %v964 = vand.u32 %v613, 4294901760
        %965 = vmatpush.msra.mxu0 %v964
        %v966 = vand.u32 %v612, 4294901760
        %967 = vmatpush.msra.mxu0 %v966
        %v968 = vand.u32 %v609, 4294901760
        %969 = vmatmul.f32.gmra.mxu0 %v968
        %v970 = vpop.f32.mrf.mxu0
        %v971 = vadd.f32 %v934, %v970
        %972 = vdwg.mxu0
        %v973 = vld [vmem:[%s587] sm:$0xff]
        %v974 = vld [vmem:[%s587 + $0x8] sm:$0xff]
        %v975 = vld [vmem:[%s587 + $0x10] sm:$0xff]
        %v976 = vld [vmem:[%s587 + $0x18] sm:$0xff]
        %v977 = vld [vmem:[%s587 + $0x20] sm:$0xff]
        %v978 = vld [vmem:[%s587 + $0x28] sm:$0xff]
        %v979 = vld [vmem:[%s587 + $0x30] sm:$0xff]
        %v980 = vld [vmem:[%s587 + $0x38] sm:$0xff]
        %v981 = vld [vmem:[%s587 + $0x40] sm:$0xff]
        %v982 = vld [vmem:[%s587 + $0x48] sm:$0xff]
        %v983 = vld [vmem:[%s587 + $0x50] sm:$0xff]
        %v984 = vld [vmem:[%s587 + $0x58] sm:$0xff]
        %v985 = vld [vmem:[%s587 + $0x60] sm:$0xff]
        %v986 = vld [vmem:[%s587 + $0x68] sm:$0xff]
        %v987 = vld [vmem:[%s587 + $0x70] sm:$0xff]
        %v988 = vld [vmem:[%s587 + $0x78] sm:$0xff]
        %v989 = vld [vmem:[%s590] sm:$0x1]
        %v991 = vperm.slane %v989, 0
        %v993 = vand.u32 %v988, 4294901760
        %994 = vmatpush.msra.mxu0 %v993
        %v995 = vand.u32 %v987, 4294901760
        %996 = vmatpush.msra.mxu0 %v995
        %v997 = vand.u32 %v986, 4294901760
        %998 = vmatpush.msra.mxu0 %v997
        %v999 = vand.u32 %v985, 4294901760
        %1000 = vmatpush.msra.mxu0 %v999
        %v1001 = vand.u32 %v984, 4294901760
        %1002 = vmatpush.msra.mxu0 %v1001
        %v1003 = vand.u32 %v983, 4294901760
        %1004 = vmatpush.msra.mxu0 %v1003
        %v1005 = vand.u32 %v982, 4294901760
        %1006 = vmatpush.msra.mxu0 %v1005
        %v1007 = vand.u32 %v981, 4294901760
        %1008 = vmatpush.msra.mxu0 %v1007
        %v1009 = vand.u32 %v980, 4294901760
        %1010 = vmatpush.msra.mxu0 %v1009
        %v1011 = vand.u32 %v979, 4294901760
        %1012 = vmatpush.msra.mxu0 %v1011
        %v1013 = vand.u32 %v978, 4294901760
        %1014 = vmatpush.msra.mxu0 %v1013
        %v1015 = vand.u32 %v977, 4294901760
        %1016 = vmatpush.msra.mxu0 %v1015
        %v1017 = vand.u32 %v976, 4294901760
        %1018 = vmatpush.msra.mxu0 %v1017
        %v1019 = vand.u32 %v975, 4294901760
        %1020 = vmatpush.msra.mxu0 %v1019
        %v1021 = vand.u32 %v974, 4294901760
        %1022 = vmatpush.msra.mxu0 %v1021
        %v1023 = vand.u32 %v973, 4294901760
        %1024 = vmatpush.msra.mxu0 %v1023
        %v1025 = vand.u32 %v610, 4294901760
        %v1026 = vsub.f32 %v610, %v1025
        %v1027 = vand.u32 %v1026, 4294901760
        %v1028 = vsub.f32 %v1026, %v1027
        %v1029 = vand.u32 %v1028, 4294901760
        %1030 = vmatmul.f32.gmra.mxu0 %v1029
        %v1031 = vpop.f32.mrf.mxu0
        %v1032 = vadd.f32 %v991, %v1031
        %1033 = vdwg.mxu0
        %v1034 = vand.u32 %v988, 4294901760
        %v1035 = vsub.f32 %v988, %v1034
        %v1036 = vand.u32 %v1035, 4294901760
        %v1037 = vsub.f32 %v1035, %v1036
        %v1038 = vand.u32 %v1037, 4294901760
        %1039 = vmatpush.msra.mxu0 %v1038
        %v1040 = vand.u32 %v987, 4294901760
        %v1041 = vsub.f32 %v987, %v1040
        %v1042 = vand.u32 %v1041, 4294901760
        %v1043 = vsub.f32 %v1041, %v1042
        %v1044 = vand.u32 %v1043, 4294901760
        %1045 = vmatpush.msra.mxu0 %v1044
        %v1046 = vand.u32 %v986, 4294901760
        %v1047 = vsub.f32 %v986, %v1046
        %v1048 = vand.u32 %v1047, 4294901760
        %v1049 = vsub.f32 %v1047, %v1048
        %v1050 = vand.u32 %v1049, 4294901760
        %1051 = vmatpush.msra.mxu0 %v1050
        %v1052 = vand.u32 %v985, 4294901760
        %v1053 = vsub.f32 %v985, %v1052
        %v1054 = vand.u32 %v1053, 4294901760
        %v1055 = vsub.f32 %v1053, %v1054
        %v1056 = vand.u32 %v1055, 4294901760
        %1057 = vmatpush.msra.mxu0 %v1056
        %v1058 = vand.u32 %v984, 4294901760
        %v1059 = vsub.f32 %v984, %v1058
        %v1060 = vand.u32 %v1059, 4294901760
        %v1061 = vsub.f32 %v1059, %v1060
        %v1062 = vand.u32 %v1061, 4294901760
        %1063 = vmatpush.msra.mxu0 %v1062
        %v1064 = vand.u32 %v983, 4294901760
        %v1065 = vsub.f32 %v983, %v1064
        %v1066 = vand.u32 %v1065, 4294901760
        %v1067 = vsub.f32 %v1065, %v1066
        %v1068 = vand.u32 %v1067, 4294901760
        %1069 = vmatpush.msra.mxu0 %v1068
        %v1070 = vand.u32 %v982, 4294901760
        %v1071 = vsub.f32 %v982, %v1070
        %v1072 = vand.u32 %v1071, 4294901760
        %v1073 = vsub.f32 %v1071, %v1072
        %v1074 = vand.u32 %v1073, 4294901760
        %1075 = vmatpush.msra.mxu0 %v1074
        %v1076 = vand.u32 %v981, 4294901760
        %v1077 = vsub.f32 %v981, %v1076
        %v1078 = vand.u32 %v1077, 4294901760
        %v1079 = vsub.f32 %v1077, %v1078
        %v1080 = vand.u32 %v1079, 4294901760
        %1081 = vmatpush.msra.mxu0 %v1080
        %v1082 = vand.u32 %v980, 4294901760
        %v1083 = vsub.f32 %v980, %v1082
        %v1084 = vand.u32 %v1083, 4294901760
        %v1085 = vsub.f32 %v1083, %v1084
        %v1086 = vand.u32 %v1085, 4294901760
        %1087 = vmatpush.msra.mxu0 %v1086
        %v1088 = vand.u32 %v979, 4294901760
        %v1089 = vsub.f32 %v979, %v1088
        %v1090 = vand.u32 %v1089, 4294901760
        %v1091 = vsub.f32 %v1089, %v1090
        %v1092 = vand.u32 %v1091, 4294901760
        %1093 = vmatpush.msra.mxu0 %v1092
        %v1094 = vand.u32 %v978, 4294901760
        %v1095 = vsub.f32 %v978, %v1094
        %v1096 = vand.u32 %v1095, 4294901760
        %v1097 = vsub.f32 %v1095, %v1096
        %v1098 = vand.u32 %v1097, 4294901760
        %1099 = vmatpush.msra.mxu0 %v1098
        %v1100 = vand.u32 %v977, 4294901760
        %v1101 = vsub.f32 %v977, %v1100
        %v1102 = vand.u32 %v1101, 4294901760
        %v1103 = vsub.f32 %v1101, %v1102
        %v1104 = vand.u32 %v1103, 4294901760
        %1105 = vmatpush.msra.mxu0 %v1104
        %v1106 = vand.u32 %v976, 4294901760
        %v1107 = vsub.f32 %v976, %v1106
        %v1108 = vand.u32 %v1107, 4294901760
        %v1109 = vsub.f32 %v1107, %v1108
        %v1110 = vand.u32 %v1109, 4294901760
        %1111 = vmatpush.msra.mxu0 %v1110
        %v1112 = vand.u32 %v975, 4294901760
        %v1113 = vsub.f32 %v975, %v1112
        %v1114 = vand.u32 %v1113, 4294901760
        %v1115 = vsub.f32 %v1113, %v1114
        %v1116 = vand.u32 %v1115, 4294901760
        %1117 = vmatpush.msra.mxu0 %v1116
        %v1118 = vand.u32 %v974, 4294901760
        %v1119 = vsub.f32 %v974, %v1118
        %v1120 = vand.u32 %v1119, 4294901760
        %v1121 = vsub.f32 %v1119, %v1120
        %v1122 = vand.u32 %v1121, 4294901760
        %1123 = vmatpush.msra.mxu0 %v1122
        %v1124 = vand.u32 %v973, 4294901760
        %v1125 = vsub.f32 %v973, %v1124
        %v1126 = vand.u32 %v1125, 4294901760
        %v1127 = vsub.f32 %v1125, %v1126
        %v1128 = vand.u32 %v1127, 4294901760
        %1129 = vmatpush.msra.mxu0 %v1128
        %v1130 = vand.u32 %v610, 4294901760
        %1131 = vmatmul.f32.gmra.mxu0 %v1130
        %v1132 = vpop.f32.mrf.mxu0
        %v1133 = vadd.f32 %v1032, %v1132
        %1134 = vdwg.mxu0
        %v1135 = vand.u32 %v988, 4294901760
        %v1136 = vsub.f32 %v988, %v1135
        %1137 = vmatpush.msra.mxu0 %v1136
        %v1138 = vand.u32 %v987, 4294901760
        %v1139 = vsub.f32 %v987, %v1138
        %1140 = vmatpush.msra.mxu0 %v1139
        %v1141 = vand.u32 %v986, 4294901760
        %v1142 = vsub.f32 %v986, %v1141
        %1143 = vmatpush.msra.mxu0 %v1142
        %v1144 = vand.u32 %v985, 4294901760
        %v1145 = vsub.f32 %v985, %v1144
        %1146 = vmatpush.msra.mxu0 %v1145
        %v1147 = vand.u32 %v984, 4294901760
        %v1148 = vsub.f32 %v984, %v1147
        %1149 = vmatpush.msra.mxu0 %v1148
        %v1150 = vand.u32 %v983, 4294901760
        %v1151 = vsub.f32 %v983, %v1150
        %1152 = vmatpush.msra.mxu0 %v1151
        %v1153 = vand.u32 %v982, 4294901760
        %v1154 = vsub.f32 %v982, %v1153
        %1155 = vmatpush.msra.mxu0 %v1154
        %v1156 = vand.u32 %v981, 4294901760
        %v1157 = vsub.f32 %v981, %v1156
        %1158 = vmatpush.msra.mxu0 %v1157
        %v1159 = vand.u32 %v980, 4294901760
        %v1160 = vsub.f32 %v980, %v1159
        %1161 = vmatpush.msra.mxu0 %v1160
        %v1162 = vand.u32 %v979, 4294901760
        %v1163 = vsub.f32 %v979, %v1162
        %1164 = vmatpush.msra.mxu0 %v1163
        %v1165 = vand.u32 %v978, 4294901760
        %v1166 = vsub.f32 %v978, %v1165
        %1167 = vmatpush.msra.mxu0 %v1166
        %v1168 = vand.u32 %v977, 4294901760
        %v1169 = vsub.f32 %v977, %v1168
        %1170 = vmatpush.msra.mxu0 %v1169
        %v1171 = vand.u32 %v976, 4294901760
        %v1172 = vsub.f32 %v976, %v1171
        %1173 = vmatpush.msra.mxu0 %v1172
        %v1174 = vand.u32 %v975, 4294901760
        %v1175 = vsub.f32 %v975, %v1174
        %1176 = vmatpush.msra.mxu0 %v1175
        %v1177 = vand.u32 %v974, 4294901760
        %v1178 = vsub.f32 %v974, %v1177
        %1179 = vmatpush.msra.mxu0 %v1178
        %v1180 = vand.u32 %v973, 4294901760
        %v1181 = vsub.f32 %v973, %v1180
        %1182 = vmatpush.msra.mxu0 %v1181
        %v1183 = vand.u32 %v610, 4294901760
        %v1184 = vsub.f32 %v610, %v1183
        %1185 = vmatmul.f32.gmra.mxu0 %v1184
        %v1186 = vpop.f32.mrf.mxu0
        %v1187 = vadd.f32 %v1133, %v1186
        %1188 = vdwg.mxu0
        %v1189 = vand.u32 %v988, 4294901760
        %1190 = vmatpush.msra.mxu0 %v1189
        %v1191 = vand.u32 %v987, 4294901760
        %1192 = vmatpush.msra.mxu0 %v1191
        %v1193 = vand.u32 %v986, 4294901760
        %1194 = vmatpush.msra.mxu0 %v1193
        %v1195 = vand.u32 %v985, 4294901760
        %1196 = vmatpush.msra.mxu0 %v1195
        %v1197 = vand.u32 %v984, 4294901760
        %1198 = vmatpush.msra.mxu0 %v1197
        %v1199 = vand.u32 %v983, 4294901760
        %1200 = vmatpush.msra.mxu0 %v1199
        %v1201 = vand.u32 %v982, 4294901760
        %1202 = vmatpush.msra.mxu0 %v1201
        %v1203 = vand.u32 %v981, 4294901760
        %1204 = vmatpush.msra.mxu0 %v1203
        %v1205 = vand.u32 %v980, 4294901760
        %1206 = vmatpush.msra.mxu0 %v1205
        %v1207 = vand.u32 %v979, 4294901760
        %1208 = vmatpush.msra.mxu0 %v1207
        %v1209 = vand.u32 %v978, 4294901760
        %1210 = vmatpush.msra.mxu0 %v1209
        %v1211 = vand.u32 %v977, 4294901760
        %1212 = vmatpush.msra.mxu0 %v1211
        %v1213 = vand.u32 %v976, 4294901760
        %1214 = vmatpush.msra.mxu0 %v1213
        %v1215 = vand.u32 %v975, 4294901760
        %1216 = vmatpush.msra.mxu0 %v1215
        %v1217 = vand.u32 %v974, 4294901760
        %1218 = vmatpush.msra.mxu0 %v1217
        %v1219 = vand.u32 %v973, 4294901760
        %1220 = vmatpush.msra.mxu0 %v1219
        %v1221 = vand.u32 %v610, 4294901760
        %v1222 = vsub.f32 %v610, %v1221
        %v1223 = vand.u32 %v1222, 4294901760
        %1224 = vmatmul.f32.gmra.mxu0 %v1223
        %v1225 = vpop.f32.mrf.mxu0
        %v1226 = vadd.f32 %v1187, %v1225
        %1227 = vdwg.mxu0
        %v1228 = vand.u32 %v988, 4294901760
        %v1229 = vsub.f32 %v988, %v1228
        %v1230 = vand.u32 %v1229, 4294901760
        %1231 = vmatpush.msra.mxu0 %v1230
        %v1232 = vand.u32 %v987, 4294901760
        %v1233 = vsub.f32 %v987, %v1232
        %v1234 = vand.u32 %v1233, 4294901760
        %1235 = vmatpush.msra.mxu0 %v1234
        %v1236 = vand.u32 %v986, 4294901760
        %v1237 = vsub.f32 %v986, %v1236
        %v1238 = vand.u32 %v1237, 4294901760
        %1239 = vmatpush.msra.mxu0 %v1238
        %v1240 = vand.u32 %v985, 4294901760
        %v1241 = vsub.f32 %v985, %v1240
        %v1242 = vand.u32 %v1241, 4294901760
        %1243 = vmatpush.msra.mxu0 %v1242
        %v1244 = vand.u32 %v984, 4294901760
        %v1245 = vsub.f32 %v984, %v1244
        %v1246 = vand.u32 %v1245, 4294901760
        %1247 = vmatpush.msra.mxu0 %v1246
        %v1248 = vand.u32 %v983, 4294901760
        %v1249 = vsub.f32 %v983, %v1248
        %v1250 = vand.u32 %v1249, 4294901760
        %1251 = vmatpush.msra.mxu0 %v1250
        %v1252 = vand.u32 %v982, 4294901760
        %v1253 = vsub.f32 %v982, %v1252
        %v1254 = vand.u32 %v1253, 4294901760
        %1255 = vmatpush.msra.mxu0 %v1254
        %v1256 = vand.u32 %v981, 4294901760
        %v1257 = vsub.f32 %v981, %v1256
        %v1258 = vand.u32 %v1257, 4294901760
        %1259 = vmatpush.msra.mxu0 %v1258
        %v1260 = vand.u32 %v980, 4294901760
        %v1261 = vsub.f32 %v980, %v1260
        %v1262 = vand.u32 %v1261, 4294901760
        %1263 = vmatpush.msra.mxu0 %v1262
        %v1264 = vand.u32 %v979, 4294901760
        %v1265 = vsub.f32 %v979, %v1264
        %v1266 = vand.u32 %v1265, 4294901760
        %1267 = vmatpush.msra.mxu0 %v1266
        %v1268 = vand.u32 %v978, 4294901760
        %v1269 = vsub.f32 %v978, %v1268
        %v1270 = vand.u32 %v1269, 4294901760
        %1271 = vmatpush.msra.mxu0 %v1270
        %v1272 = vand.u32 %v977, 4294901760
        %v1273 = vsub.f32 %v977, %v1272
        %v1274 = vand.u32 %v1273, 4294901760
        %1275 = vmatpush.msra.mxu0 %v1274
        %v1276 = vand.u32 %v976, 4294901760
        %v1277 = vsub.f32 %v976, %v1276
        %v1278 = vand.u32 %v1277, 4294901760
        %1279 = vmatpush.msra.mxu0 %v1278
        %v1280 = vand.u32 %v975, 4294901760
        %v1281 = vsub.f32 %v975, %v1280
        %v1282 = vand.u32 %v1281, 4294901760
        %1283 = vmatpush.msra.mxu0 %v1282
        %v1284 = vand.u32 %v974, 4294901760
        %v1285 = vsub.f32 %v974, %v1284
        %v1286 = vand.u32 %v1285, 4294901760
        %1287 = vmatpush.msra.mxu0 %v1286
        %v1288 = vand.u32 %v973, 4294901760
        %v1289 = vsub.f32 %v973, %v1288
        %v1290 = vand.u32 %v1289, 4294901760
        %1291 = vmatpush.msra.mxu0 %v1290
        %v1292 = vand.u32 %v610, 4294901760
        %1293 = vmatmul.f32.gmra.mxu0 %v1292
        %v1294 = vpop.f32.mrf.mxu0
        %v1295 = vadd.f32 %v1226, %v1294
        %1296 = vdwg.mxu0
        %v1297 = vand.u32 %v988, 4294901760
        %1298 = vmatpush.msra.mxu0 %v1297
        %v1299 = vand.u32 %v987, 4294901760
        %1300 = vmatpush.msra.mxu0 %v1299
        %v1301 = vand.u32 %v986, 4294901760
        %1302 = vmatpush.msra.mxu0 %v1301
        %v1303 = vand.u32 %v985, 4294901760
        %1304 = vmatpush.msra.mxu0 %v1303
        %v1305 = vand.u32 %v984, 4294901760
        %1306 = vmatpush.msra.mxu0 %v1305
        %v1307 = vand.u32 %v983, 4294901760
        %1308 = vmatpush.msra.mxu0 %v1307
        %v1309 = vand.u32 %v982, 4294901760
        %1310 = vmatpush.msra.mxu0 %v1309
        %v1311 = vand.u32 %v981, 4294901760
        %1312 = vmatpush.msra.mxu0 %v1311
        %v1313 = vand.u32 %v980, 4294901760
        %1314 = vmatpush.msra.mxu0 %v1313
        %v1315 = vand.u32 %v979, 4294901760
        %1316 = vmatpush.msra.mxu0 %v1315
        %v1317 = vand.u32 %v978, 4294901760
        %1318 = vmatpush.msra.mxu0 %v1317
        %v1319 = vand.u32 %v977, 4294901760
        %1320 = vmatpush.msra.mxu0 %v1319
        %v1321 = vand.u32 %v976, 4294901760
        %1322 = vmatpush.msra.mxu0 %v1321
        %v1323 = vand.u32 %v975, 4294901760
        %1324 = vmatpush.msra.mxu0 %v1323
        %v1325 = vand.u32 %v974, 4294901760
        %1326 = vmatpush.msra.mxu0 %v1325
        %v1327 = vand.u32 %v973, 4294901760
        %1328 = vmatpush.msra.mxu0 %v1327
        %v1329 = vand.u32 %v610, 4294901760
        %1330 = vmatmul.f32.gmra.mxu0 %v1329
        %v1331 = vpop.f32.mrf.mxu0
        %v1332 = vadd.f32 %v1295, %v1331
        %1333 = vdwg.mxu0
        %v1334 = vld [vmem:[%s595] sm:$0xff]
        %v1335 = vld [vmem:[%s595 + $0x8] sm:$0xff]
        %v1336 = vld [vmem:[%s595 + $0x10] sm:$0xff]
        %v1337 = vld [vmem:[%s595 + $0x18] sm:$0xff]
        %v1338 = vld [vmem:[%s595 + $0x20] sm:$0xff]
        %v1339 = vld [vmem:[%s595 + $0x28] sm:$0xff]
        %v1340 = vld [vmem:[%s595 + $0x30] sm:$0xff]
        %v1341 = vld [vmem:[%s595 + $0x38] sm:$0xff]
        %v1342 = vld [vmem:[%s595 + $0x40] sm:$0xff]
        %v1343 = vld [vmem:[%s595 + $0x48] sm:$0xff]
        %v1344 = vld [vmem:[%s595 + $0x50] sm:$0xff]
        %v1345 = vld [vmem:[%s595 + $0x58] sm:$0xff]
        %v1346 = vld [vmem:[%s595 + $0x60] sm:$0xff]
        %v1347 = vld [vmem:[%s595 + $0x68] sm:$0xff]
        %v1348 = vld [vmem:[%s595 + $0x70] sm:$0xff]
        %v1349 = vld [vmem:[%s595 + $0x78] sm:$0xff]
        %v1350 = vld [vmem:[%s598] sm:$0x1]
        %v1352 = vperm.slane %v1350, 0
        %v1354 = vand.u32 %v1349, 4294901760
        %1355 = vmatpush.msra.mxu0 %v1354
        %v1356 = vand.u32 %v1348, 4294901760
        %1357 = vmatpush.msra.mxu0 %v1356
        %v1358 = vand.u32 %v1347, 4294901760
        %1359 = vmatpush.msra.mxu0 %v1358
        %v1360 = vand.u32 %v1346, 4294901760
        %1361 = vmatpush.msra.mxu0 %v1360
        %v1362 = vand.u32 %v1345, 4294901760
        %1363 = vmatpush.msra.mxu0 %v1362
        %v1364 = vand.u32 %v1344, 4294901760
        %1365 = vmatpush.msra.mxu0 %v1364
        %v1366 = vand.u32 %v1343, 4294901760
        %1367 = vmatpush.msra.mxu0 %v1366
        %v1368 = vand.u32 %v1342, 4294901760
        %1369 = vmatpush.msra.mxu0 %v1368
        %v1370 = vand.u32 %v1341, 4294901760
        %1371 = vmatpush.msra.mxu0 %v1370
        %v1372 = vand.u32 %v1340, 4294901760
        %1373 = vmatpush.msra.mxu0 %v1372
        %v1374 = vand.u32 %v1339, 4294901760
        %1375 = vmatpush.msra.mxu0 %v1374
        %v1376 = vand.u32 %v1338, 4294901760
        %1377 = vmatpush.msra.mxu0 %v1376
        %v1378 = vand.u32 %v1337, 4294901760
        %1379 = vmatpush.msra.mxu0 %v1378
        %v1380 = vand.u32 %v1336, 4294901760
        %1381 = vmatpush.msra.mxu0 %v1380
        %v1382 = vand.u32 %v1335, 4294901760
        %1383 = vmatpush.msra.mxu0 %v1382
        %v1384 = vand.u32 %v1334, 4294901760
        %1385 = vmatpush.msra.mxu0 %v1384
        %v1386 = vand.u32 %v611, 4294901760
        %v1387 = vsub.f32 %v611, %v1386
        %v1388 = vand.u32 %v1387, 4294901760
        %v1389 = vsub.f32 %v1387, %v1388
        %v1390 = vand.u32 %v1389, 4294901760
        %1391 = vmatmul.f32.gmra.mxu0 %v1390
        %v1392 = vpop.f32.mrf.mxu0
        %v1393 = vadd.f32 %v1352, %v1392
        %1394 = vdwg.mxu0
        %v1395 = vand.u32 %v1349, 4294901760
        %v1396 = vsub.f32 %v1349, %v1395
        %v1397 = vand.u32 %v1396, 4294901760
        %v1398 = vsub.f32 %v1396, %v1397
        %v1399 = vand.u32 %v1398, 4294901760
        %1400 = vmatpush.msra.mxu0 %v1399
        %v1401 = vand.u32 %v1348, 4294901760
        %v1402 = vsub.f32 %v1348, %v1401
        %v1403 = vand.u32 %v1402, 4294901760
        %v1404 = vsub.f32 %v1402, %v1403
        %v1405 = vand.u32 %v1404, 4294901760
        %1406 = vmatpush.msra.mxu0 %v1405
        %v1407 = vand.u32 %v1347, 4294901760
        %v1408 = vsub.f32 %v1347, %v1407
        %v1409 = vand.u32 %v1408, 4294901760
        %v1410 = vsub.f32 %v1408, %v1409
        %v1411 = vand.u32 %v1410, 4294901760
        %1412 = vmatpush.msra.mxu0 %v1411
        %v1413 = vand.u32 %v1346, 4294901760
        %v1414 = vsub.f32 %v1346, %v1413
        %v1415 = vand.u32 %v1414, 4294901760
        %v1416 = vsub.f32 %v1414, %v1415
        %v1417 = vand.u32 %v1416, 4294901760
        %1418 = vmatpush.msra.mxu0 %v1417
        %v1419 = vand.u32 %v1345, 4294901760
        %v1420 = vsub.f32 %v1345, %v1419
        %v1421 = vand.u32 %v1420, 4294901760
        %v1422 = vsub.f32 %v1420, %v1421
        %v1423 = vand.u32 %v1422, 4294901760
        %1424 = vmatpush.msra.mxu0 %v1423
        %v1425 = vand.u32 %v1344, 4294901760
        %v1426 = vsub.f32 %v1344, %v1425
        %v1427 = vand.u32 %v1426, 4294901760
        %v1428 = vsub.f32 %v1426, %v1427
        %v1429 = vand.u32 %v1428, 4294901760
        %1430 = vmatpush.msra.mxu0 %v1429
        %v1431 = vand.u32 %v1343, 4294901760
        %v1432 = vsub.f32 %v1343, %v1431
        %v1433 = vand.u32 %v1432, 4294901760
        %v1434 = vsub.f32 %v1432, %v1433
        %v1435 = vand.u32 %v1434, 4294901760
        %1436 = vmatpush.msra.mxu0 %v1435
        %v1437 = vand.u32 %v1342, 4294901760
        %v1438 = vsub.f32 %v1342, %v1437
        %v1439 = vand.u32 %v1438, 4294901760
        %v1440 = vsub.f32 %v1438, %v1439
        %v1441 = vand.u32 %v1440, 4294901760
        %1442 = vmatpush.msra.mxu0 %v1441
        %v1443 = vand.u32 %v1341, 4294901760
        %v1444 = vsub.f32 %v1341, %v1443
        %v1445 = vand.u32 %v1444, 4294901760
        %v1446 = vsub.f32 %v1444, %v1445
        %v1447 = vand.u32 %v1446, 4294901760
        %1448 = vmatpush.msra.mxu0 %v1447
        %v1449 = vand.u32 %v1340, 4294901760
        %v1450 = vsub.f32 %v1340, %v1449
        %v1451 = vand.u32 %v1450, 4294901760
        %v1452 = vsub.f32 %v1450, %v1451
        %v1453 = vand.u32 %v1452, 4294901760
        %1454 = vmatpush.msra.mxu0 %v1453
        %v1455 = vand.u32 %v1339, 4294901760
        %v1456 = vsub.f32 %v1339, %v1455
        %v1457 = vand.u32 %v1456, 4294901760
        %v1458 = vsub.f32 %v1456, %v1457
        %v1459 = vand.u32 %v1458, 4294901760
        %1460 = vmatpush.msra.mxu0 %v1459
        %v1461 = vand.u32 %v1338, 4294901760
        %v1462 = vsub.f32 %v1338, %v1461
        %v1463 = vand.u32 %v1462, 4294901760
        %v1464 = vsub.f32 %v1462, %v1463
        %v1465 = vand.u32 %v1464, 4294901760
        %1466 = vmatpush.msra.mxu0 %v1465
        %v1467 = vand.u32 %v1337, 4294901760
        %v1468 = vsub.f32 %v1337, %v1467
        %v1469 = vand.u32 %v1468, 4294901760
        %v1470 = vsub.f32 %v1468, %v1469
        %v1471 = vand.u32 %v1470, 4294901760
        %1472 = vmatpush.msra.mxu0 %v1471
        %v1473 = vand.u32 %v1336, 4294901760
        %v1474 = vsub.f32 %v1336, %v1473
        %v1475 = vand.u32 %v1474, 4294901760
        %v1476 = vsub.f32 %v1474, %v1475
        %v1477 = vand.u32 %v1476, 4294901760
        %1478 = vmatpush.msra.mxu0 %v1477
        %v1479 = vand.u32 %v1335, 4294901760
        %v1480 = vsub.f32 %v1335, %v1479
        %v1481 = vand.u32 %v1480, 4294901760
        %v1482 = vsub.f32 %v1480, %v1481
        %v1483 = vand.u32 %v1482, 4294901760
        %1484 = vmatpush.msra.mxu0 %v1483
        %v1485 = vand.u32 %v1334, 4294901760
        %v1486 = vsub.f32 %v1334, %v1485
        %v1487 = vand.u32 %v1486, 4294901760
        %v1488 = vsub.f32 %v1486, %v1487
        %v1489 = vand.u32 %v1488, 4294901760
        %1490 = vmatpush.msra.mxu0 %v1489
        %v1491 = vand.u32 %v611, 4294901760
        %1492 = vmatmul.f32.gmra.mxu0 %v1491
        %v1493 = vpop.f32.mrf.mxu0
        %v1494 = vadd.f32 %v1393, %v1493
        %1495 = vdwg.mxu0
        %v1496 = vand.u32 %v1349, 4294901760
        %v1497 = vsub.f32 %v1349, %v1496
        %1498 = vmatpush.msra.mxu0 %v1497
        %v1499 = vand.u32 %v1348, 4294901760
        %v1500 = vsub.f32 %v1348, %v1499
        %1501 = vmatpush.msra.mxu0 %v1500
        %v1502 = vand.u32 %v1347, 4294901760
        %v1503 = vsub.f32 %v1347, %v1502
        %1504 = vmatpush.msra.mxu0 %v1503
        %v1505 = vand.u32 %v1346, 4294901760
        %v1506 = vsub.f32 %v1346, %v1505
        %1507 = vmatpush.msra.mxu0 %v1506
        %v1508 = vand.u32 %v1345, 4294901760
        %v1509 = vsub.f32 %v1345, %v1508
        %1510 = vmatpush.msra.mxu0 %v1509
        %v1511 = vand.u32 %v1344, 4294901760
        %v1512 = vsub.f32 %v1344, %v1511
        %1513 = vmatpush.msra.mxu0 %v1512
        %v1514 = vand.u32 %v1343, 4294901760
        %v1515 = vsub.f32 %v1343, %v1514
        %1516 = vmatpush.msra.mxu0 %v1515
        %v1517 = vand.u32 %v1342, 4294901760
        %v1518 = vsub.f32 %v1342, %v1517
        %1519 = vmatpush.msra.mxu0 %v1518
        %v1520 = vand.u32 %v1341, 4294901760
        %v1521 = vsub.f32 %v1341, %v1520
        %1522 = vmatpush.msra.mxu0 %v1521
        %v1523 = vand.u32 %v1340, 4294901760
        %v1524 = vsub.f32 %v1340, %v1523
        %1525 = vmatpush.msra.mxu0 %v1524
        %v1526 = vand.u32 %v1339, 4294901760
        %v1527 = vsub.f32 %v1339, %v1526
        %1528 = vmatpush.msra.mxu0 %v1527
        %v1529 = vand.u32 %v1338, 4294901760
        %v1530 = vsub.f32 %v1338, %v1529
        %1531 = vmatpush.msra.mxu0 %v1530
        %v1532 = vand.u32 %v1337, 4294901760
        %v1533 = vsub.f32 %v1337, %v1532
        %1534 = vmatpush.msra.mxu0 %v1533
        %v1535 = vand.u32 %v1336, 4294901760
        %v1536 = vsub.f32 %v1336, %v1535
        %1537 = vmatpush.msra.mxu0 %v1536
        %v1538 = vand.u32 %v1335, 4294901760
        %v1539 = vsub.f32 %v1335, %v1538
        %1540 = vmatpush.msra.mxu0 %v1539
        %v1541 = vand.u32 %v1334, 4294901760
        %v1542 = vsub.f32 %v1334, %v1541
        %1543 = vmatpush.msra.mxu0 %v1542
        %v1544 = vand.u32 %v611, 4294901760
        %v1545 = vsub.f32 %v611, %v1544
        %1546 = vmatmul.f32.gmra.mxu0 %v1545
        %v1547 = vpop.f32.mrf.mxu0
        %v1548 = vadd.f32 %v1494, %v1547
        %1549 = vdwg.mxu0
        %v1550 = vand.u32 %v1349, 4294901760
        %1551 = vmatpush.msra.mxu0 %v1550
        %v1552 = vand.u32 %v1348, 4294901760
        %1553 = vmatpush.msra.mxu0 %v1552
        %v1554 = vand.u32 %v1347, 4294901760
        %1555 = vmatpush.msra.mxu0 %v1554
        %v1556 = vand.u32 %v1346, 4294901760
        %1557 = vmatpush.msra.mxu0 %v1556
        %v1558 = vand.u32 %v1345, 4294901760
        %1559 = vmatpush.msra.mxu0 %v1558
        %v1560 = vand.u32 %v1344, 4294901760
        %1561 = vmatpush.msra.mxu0 %v1560
        %v1562 = vand.u32 %v1343, 4294901760
        %1563 = vmatpush.msra.mxu0 %v1562
        %v1564 = vand.u32 %v1342, 4294901760
        %1565 = vmatpush.msra.mxu0 %v1564
        %v1566 = vand.u32 %v1341, 4294901760
        %1567 = vmatpush.msra.mxu0 %v1566
        %v1568 = vand.u32 %v1340, 4294901760
        %1569 = vmatpush.msra.mxu0 %v1568
        %v1570 = vand.u32 %v1339, 4294901760
        %1571 = vmatpush.msra.mxu0 %v1570
        %v1572 = vand.u32 %v1338, 4294901760
        %1573 = vmatpush.msra.mxu0 %v1572
        %v1574 = vand.u32 %v1337, 4294901760
        %1575 = vmatpush.msra.mxu0 %v1574
        %v1576 = vand.u32 %v1336, 4294901760
        %1577 = vmatpush.msra.mxu0 %v1576
        %v1578 = vand.u32 %v1335, 4294901760
        %1579 = vmatpush.msra.mxu0 %v1578
        %v1580 = vand.u32 %v1334, 4294901760
        %1581 = vmatpush.msra.mxu0 %v1580
        %v1582 = vand.u32 %v611, 4294901760
        %v1583 = vsub.f32 %v611, %v1582
        %v1584 = vand.u32 %v1583, 4294901760
        %1585 = vmatmul.f32.gmra.mxu0 %v1584
        %v1586 = vpop.f32.mrf.mxu0
        %v1587 = vadd.f32 %v1548, %v1586
        %1588 = vdwg.mxu0
        %v1589 = vand.u32 %v1349, 4294901760
        %v1590 = vsub.f32 %v1349, %v1589
        %v1591 = vand.u32 %v1590, 4294901760
        %1592 = vmatpush.msra.mxu0 %v1591
        %v1593 = vand.u32 %v1348, 4294901760
        %v1594 = vsub.f32 %v1348, %v1593
        %v1595 = vand.u32 %v1594, 4294901760
        %1596 = vmatpush.msra.mxu0 %v1595
        %v1597 = vand.u32 %v1347, 4294901760
        %v1598 = vsub.f32 %v1347, %v1597
        %v1599 = vand.u32 %v1598, 4294901760
        %1600 = vmatpush.msra.mxu0 %v1599
        %v1601 = vand.u32 %v1346, 4294901760
        %v1602 = vsub.f32 %v1346, %v1601
        %v1603 = vand.u32 %v1602, 4294901760
        %1604 = vmatpush.msra.mxu0 %v1603
        %v1605 = vand.u32 %v1345, 4294901760
        %v1606 = vsub.f32 %v1345, %v1605
        %v1607 = vand.u32 %v1606, 4294901760
        %1608 = vmatpush.msra.mxu0 %v1607
        %v1609 = vand.u32 %v1344, 4294901760
        %v1610 = vsub.f32 %v1344, %v1609
        %v1611 = vand.u32 %v1610, 4294901760
        %1612 = vmatpush.msra.mxu0 %v1611
        %v1613 = vand.u32 %v1343, 4294901760
        %v1614 = vsub.f32 %v1343, %v1613
        %v1615 = vand.u32 %v1614, 4294901760
        %1616 = vmatpush.msra.mxu0 %v1615
        %v1617 = vand.u32 %v1342, 4294901760
        %v1618 = vsub.f32 %v1342, %v1617
        %v1619 = vand.u32 %v1618, 4294901760
        %1620 = vmatpush.msra.mxu0 %v1619
        %v1621 = vand.u32 %v1341, 4294901760
        %v1622 = vsub.f32 %v1341, %v1621
        %v1623 = vand.u32 %v1622, 4294901760
        %1624 = vmatpush.msra.mxu0 %v1623
        %v1625 = vand.u32 %v1340, 4294901760
        %v1626 = vsub.f32 %v1340, %v1625
        %v1627 = vand.u32 %v1626, 4294901760
        %1628 = vmatpush.msra.mxu0 %v1627
        %v1629 = vand.u32 %v1339, 4294901760
        %v1630 = vsub.f32 %v1339, %v1629
        %v1631 = vand.u32 %v1630, 4294901760
        %1632 = vmatpush.msra.mxu0 %v1631
        %v1633 = vand.u32 %v1338, 4294901760
        %v1634 = vsub.f32 %v1338, %v1633
        %v1635 = vand.u32 %v1634, 4294901760
        %1636 = vmatpush.msra.mxu0 %v1635
        %v1637 = vand.u32 %v1337, 4294901760
        %v1638 = vsub.f32 %v1337, %v1637
        %v1639 = vand.u32 %v1638, 4294901760
        %1640 = vmatpush.msra.mxu0 %v1639
        %v1641 = vand.u32 %v1336, 4294901760
        %v1642 = vsub.f32 %v1336, %v1641
        %v1643 = vand.u32 %v1642, 4294901760
        %1644 = vmatpush.msra.mxu0 %v1643
        %v1645 = vand.u32 %v1335, 4294901760
        %v1646 = vsub.f32 %v1335, %v1645
        %v1647 = vand.u32 %v1646, 4294901760
        %1648 = vmatpush.msra.mxu0 %v1647
        %v1649 = vand.u32 %v1334, 4294901760
        %v1650 = vsub.f32 %v1334, %v1649
        %v1651 = vand.u32 %v1650, 4294901760
        %1652 = vmatpush.msra.mxu0 %v1651
        %v1653 = vand.u32 %v611, 4294901760
        %1654 = vmatmul.f32.gmra.mxu0 %v1653
        %v1655 = vpop.f32.mrf.mxu0
        %v1656 = vadd.f32 %v1587, %v1655
        %1657 = vdwg.mxu0
        %v1658 = vand.u32 %v1349, 4294901760
        %1659 = vmatpush.msra.mxu0 %v1658
        %v1660 = vand.u32 %v1348, 4294901760
        %1661 = vmatpush.msra.mxu0 %v1660
        %v1662 = vand.u32 %v1347, 4294901760
        %1663 = vmatpush.msra.mxu0 %v1662
        %v1664 = vand.u32 %v1346, 4294901760
        %1665 = vmatpush.msra.mxu0 %v1664
        %v1666 = vand.u32 %v1345, 4294901760
        %1667 = vmatpush.msra.mxu0 %v1666
        %v1668 = vand.u32 %v1344, 4294901760
        %1669 = vmatpush.msra.mxu0 %v1668
        %v1670 = vand.u32 %v1343, 4294901760
        %1671 = vmatpush.msra.mxu0 %v1670
        %v1672 = vand.u32 %v1342, 4294901760
        %1673 = vmatpush.msra.mxu0 %v1672
        %v1674 = vand.u32 %v1341, 4294901760
        %1675 = vmatpush.msra.mxu0 %v1674
        %v1676 = vand.u32 %v1340, 4294901760
        %1677 = vmatpush.msra.mxu0 %v1676
        %v1678 = vand.u32 %v1339, 4294901760
        %1679 = vmatpush.msra.mxu0 %v1678
        %v1680 = vand.u32 %v1338, 4294901760
        %1681 = vmatpush.msra.mxu0 %v1680
        %v1682 = vand.u32 %v1337, 4294901760
        %1683 = vmatpush.msra.mxu0 %v1682
        %v1684 = vand.u32 %v1336, 4294901760
        %1685 = vmatpush.msra.mxu0 %v1684
        %v1686 = vand.u32 %v1335, 4294901760
        %1687 = vmatpush.msra.mxu0 %v1686
        %v1688 = vand.u32 %v1334, 4294901760
        %1689 = vmatpush.msra.mxu0 %v1688
        %v1690 = vand.u32 %v611, 4294901760
        %1691 = vmatmul.f32.gmra.mxu0 %v1690
        %v1692 = vpop.f32.mrf.mxu0
        %v1693 = vadd.f32 %v1656, %v1692
        %1694 = vdwg.mxu0
        %v1695 = vmul.f32 %v971, 0.17677669
        %vm1696 = vcmask 261120
        %v1698 = vsel %vm1696, %v1695, 0
        %v1701 = vsel %vm1696, %v1332, 0
        %1703 = vmatpush.xpose.msra.mxu0 0.0
        %1704 = vmatpush.xpose.msra.mxu0 0.0
        %1705 = vmatpush.xpose.msra.mxu0 0.0
        %1706 = vmatpush.xpose.msra.mxu0 0.0
        %1707 = vmatpush.xpose.msra.mxu0 0.0
        %1708 = vmatpush.xpose.msra.mxu0 0.0
        %1709 = vmatpush.xpose.msra.mxu0 0.0
        %1710 = vmatpush.xpose.msra.mxu0 0.0
        %1711 = vmatpush.xpose.msra.mxu0 0.0
        %1712 = vmatpush.xpose.msra.mxu0 0.0
        %1713 = vmatpush.xpose.msra.mxu0 0.0
        %1714 = vmatpush.xpose.msra.mxu0 0.0
        %1715 = vmatpush.xpose.msra.mxu0 0.0
        %1716 = vmatpush.xpose.msra.mxu0 0.0
        %1717 = vmatpush.xpose.msra.mxu0 0.0
        %v1718 = vand.u32 %v1701, 4294901760
        %1719 = vmatpush.xpose.msra.mxu0 %v1718
        %v1720 = vand.u32 %v1698, 4294901760
        %v1721 = vsub.f32 %v1698, %v1720
        %v1722 = vand.u32 %v1721, 4294901760
        %v1723 = vsub.f32 %v1721, %v1722
        %v1724 = vand.u32 %v1723, 4294901760
        %1725 = vmatmul.f32.gmra.mxu0 %v1724
        %v1726 = vpop.f32.mrf.mxu0
        %v1727 = vadd.f32 0.0, %v1726
        %1728 = vdwg.mxu0
        %1729 = vmatpush.xpose.msra.mxu0 0.0
        %1730 = vmatpush.xpose.msra.mxu0 0.0
        %1731 = vmatpush.xpose.msra.mxu0 0.0
        %1732 = vmatpush.xpose.msra.mxu0 0.0
        %1733 = vmatpush.xpose.msra.mxu0 0.0
        %1734 = vmatpush.xpose.msra.mxu0 0.0
        %1735 = vmatpush.xpose.msra.mxu0 0.0
        %1736 = vmatpush.xpose.msra.mxu0 0.0
        %1737 = vmatpush.xpose.msra.mxu0 0.0
        %1738 = vmatpush.xpose.msra.mxu0 0.0
        %1739 = vmatpush.xpose.msra.mxu0 0.0
        %1740 = vmatpush.xpose.msra.mxu0 0.0
        %1741 = vmatpush.xpose.msra.mxu0 0.0
        %1742 = vmatpush.xpose.msra.mxu0 0.0
        %1743 = vmatpush.xpose.msra.mxu0 0.0
        %v1744 = vand.u32 %v1701, 4294901760
        %v1745 = vsub.f32 %v1701, %v1744
        %v1746 = vand.u32 %v1745, 4294901760
        %v1747 = vsub.f32 %v1745, %v1746
        %v1748 = vand.u32 %v1747, 4294901760
        %1749 = vmatpush.xpose.msra.mxu0 %v1748
        %v1750 = vand.u32 %v1698, 4294901760
        %1751 = vmatmul.f32.gmra.mxu0 %v1750
        %v1752 = vpop.f32.mrf.mxu0
        %v1753 = vadd.f32 %v1727, %v1752
        %1754 = vdwg.mxu0
        %1755 = vmatpush.xpose.msra.mxu0 0.0
        %1756 = vmatpush.xpose.msra.mxu0 0.0
        %1757 = vmatpush.xpose.msra.mxu0 0.0
        %1758 = vmatpush.xpose.msra.mxu0 0.0
        %1759 = vmatpush.xpose.msra.mxu0 0.0
        %1760 = vmatpush.xpose.msra.mxu0 0.0
        %1761 = vmatpush.xpose.msra.mxu0 0.0
        %1762 = vmatpush.xpose.msra.mxu0 0.0
        %1763 = vmatpush.xpose.msra.mxu0 0.0
        %1764 = vmatpush.xpose.msra.mxu0 0.0
        %1765 = vmatpush.xpose.msra.mxu0 0.0
        %1766 = vmatpush.xpose.msra.mxu0 0.0
        %1767 = vmatpush.xpose.msra.mxu0 0.0
        %1768 = vmatpush.xpose.msra.mxu0 0.0
        %1769 = vmatpush.xpose.msra.mxu0 0.0
        %v1770 = vand.u32 %v1701, 4294901760
        %v1771 = vsub.f32 %v1701, %v1770
        %1772 = vmatpush.xpose.msra.mxu0 %v1771
        %v1773 = vand.u32 %v1698, 4294901760
        %v1774 = vsub.f32 %v1698, %v1773
        %1775 = vmatmul.f32.gmra.mxu0 %v1774
        %v1776 = vpop.f32.mrf.mxu0
        %v1777 = vadd.f32 %v1753, %v1776
        %1778 = vdwg.mxu0
        %1779 = vmatpush.xpose.msra.mxu0 0.0
        %1780 = vmatpush.xpose.msra.mxu0 0.0
        %1781 = vmatpush.xpose.msra.mxu0 0.0
        %1782 = vmatpush.xpose.msra.mxu0 0.0
        %1783 = vmatpush.xpose.msra.mxu0 0.0
        %1784 = vmatpush.xpose.msra.mxu0 0.0
        %1785 = vmatpush.xpose.msra.mxu0 0.0
        %1786 = vmatpush.xpose.msra.mxu0 0.0
        %1787 = vmatpush.xpose.msra.mxu0 0.0
        %1788 = vmatpush.xpose.msra.mxu0 0.0
        %1789 = vmatpush.xpose.msra.mxu0 0.0
        %1790 = vmatpush.xpose.msra.mxu0 0.0
        %1791 = vmatpush.xpose.msra.mxu0 0.0
        %1792 = vmatpush.xpose.msra.mxu0 0.0
        %1793 = vmatpush.xpose.msra.mxu0 0.0
        %v1794 = vand.u32 %v1701, 4294901760
        %1795 = vmatpush.xpose.msra.mxu0 %v1794
        %v1796 = vand.u32 %v1698, 4294901760
        %v1797 = vsub.f32 %v1698, %v1796
        %v1798 = vand.u32 %v1797, 4294901760
        %1799 = vmatmul.f32.gmra.mxu0 %v1798
        %v1800 = vpop.f32.mrf.mxu0
        %v1801 = vadd.f32 %v1777, %v1800
        %1802 = vdwg.mxu0
        %1803 = vmatpush.xpose.msra.mxu0 0.0
        %1804 = vmatpush.xpose.msra.mxu0 0.0
        %1805 = vmatpush.xpose.msra.mxu0 0.0
        %1806 = vmatpush.xpose.msra.mxu0 0.0
        %1807 = vmatpush.xpose.msra.mxu0 0.0
        %1808 = vmatpush.xpose.msra.mxu0 0.0
        %1809 = vmatpush.xpose.msra.mxu0 0.0
        %1810 = vmatpush.xpose.msra.mxu0 0.0
        %1811 = vmatpush.xpose.msra.mxu0 0.0
        %1812 = vmatpush.xpose.msra.mxu0 0.0
        %1813 = vmatpush.xpose.msra.mxu0 0.0
        %1814 = vmatpush.xpose.msra.mxu0 0.0
        %1815 = vmatpush.xpose.msra.mxu0 0.0
        %1816 = vmatpush.xpose.msra.mxu0 0.0
        %1817 = vmatpush.xpose.msra.mxu0 0.0
        %v1818 = vand.u32 %v1701, 4294901760
        %v1819 = vsub.f32 %v1701, %v1818
        %v1820 = vand.u32 %v1819, 4294901760
        %1821 = vmatpush.xpose.msra.mxu0 %v1820
        %v1822 = vand.u32 %v1698, 4294901760
        %1823 = vmatmul.f32.gmra.mxu0 %v1822
        %v1824 = vpop.f32.mrf.mxu0
        %v1825 = vadd.f32 %v1801, %v1824
        %1826 = vdwg.mxu0
        %1827 = vmatpush.xpose.msra.mxu0 0.0
        %1828 = vmatpush.xpose.msra.mxu0 0.0
        %1829 = vmatpush.xpose.msra.mxu0 0.0
        %1830 = vmatpush.xpose.msra.mxu0 0.0
        %1831 = vmatpush.xpose.msra.mxu0 0.0
        %1832 = vmatpush.xpose.msra.mxu0 0.0
        %1833 = vmatpush.xpose.msra.mxu0 0.0
        %1834 = vmatpush.xpose.msra.mxu0 0.0
        %1835 = vmatpush.xpose.msra.mxu0 0.0
        %1836 = vmatpush.xpose.msra.mxu0 0.0
        %1837 = vmatpush.xpose.msra.mxu0 0.0
        %1838 = vmatpush.xpose.msra.mxu0 0.0
        %1839 = vmatpush.xpose.msra.mxu0 0.0
        %1840 = vmatpush.xpose.msra.mxu0 0.0
        %1841 = vmatpush.xpose.msra.mxu0 0.0
        %v1842 = vand.u32 %v1701, 4294901760
        %1843 = vmatpush.xpose.msra.mxu0 %v1842
        %v1844 = vand.u32 %v1698, 4294901760
        %1845 = vmatmul.f32.gmra.mxu0 %v1844
        %v1846 = vpop.f32.mrf.mxu0
        %v1847 = vadd.f32 %v1825, %v1846
        %1848 = vdwg.mxu0
        %vm1849 = vcmask 64512
        %v1850 = vsel %vm1849, %v1847, -inf
        %1851 = vmax.xlane.f32.xlu0 %v1850
        %v1852 = vpop.xlane.xlu0 %1851
        %v1853 = vsub.f32 %v1847, %v1852
        %v1854 = vmul.f32 %v1853, 1.442695
        %v1855 = vpow.pop %v1854
        %v1856 = vsel %vm1849, %v1855, 0.0
        %1857 = vadd.xlane.f32.xlu0 %v1856
        %v1858 = vpop.xlane.xlu0 %1857
        %v1859 = vrcp.pop %v1858
        %v1860 = vmul.f32 %v1858, %v1859
        %v1861 = vsub.f32 1.0, %v1860
        %v1862 = vmul.f32 %v1859, %v1861
        %v1863 = vadd.f32 %v1859, %v1862
        %vm1864 = vweird.f32 %v1858
        %vm1865 = vweird.f32 %v1859
        %vm1866 = vmor %vm1864, %vm1865
        %v1867 = vsel %vm1866, %v1859, %v1863
        %v1868 = vand.u32 2147483647, %v1858
        %vm1869 = vcmp.eq.f32.partialorder %v1868, 8.507059e+37
        %v1870 = vand.u32 %v1858, 2147483648
        %v1871 = vor.u32 1.1754944e-38, %v1870
        %v1872 = vsel %vm1869, %v1871, %v1867
        %v1873 = vmul.f32 %v1855, %v1872
        %v1875 = vsel %vm1849, %v1873, 0
        %1877 = vmatpush.msra.mxu0 0.0
        %1878 = vmatpush.msra.mxu0 0.0
        %1879 = vmatpush.msra.mxu0 0.0
        %1880 = vmatpush.msra.mxu0 0.0
        %1881 = vmatpush.msra.mxu0 0.0
        %1882 = vmatpush.msra.mxu0 0.0
        %1883 = vmatpush.msra.mxu0 0.0
        %1884 = vmatpush.msra.mxu0 0.0
        %1885 = vmatpush.msra.mxu0 0.0
        %1886 = vmatpush.msra.mxu0 0.0
        %1887 = vmatpush.msra.mxu0 0.0
        %1888 = vmatpush.msra.mxu0 0.0
        %1889 = vmatpush.msra.mxu0 0.0
        %1890 = vmatpush.msra.mxu0 0.0
        %1891 = vmatpush.msra.mxu0 0.0
        %v1892 = vand.u32 %v1693, 4294901760
        %1893 = vmatpush.msra.mxu0 %v1892
        %v1894 = vand.u32 %v1875, 4294901760
        %v1895 = vsub.f32 %v1875, %v1894
        %v1896 = vand.u32 %v1895, 4294901760
        %v1897 = vsub.f32 %v1895, %v1896
        %v1898 = vand.u32 %v1897, 4294901760
        %1899 = vmatmul.f32.gmra.mxu0 %v1898
        %v1900 = vpop.f32.mrf.mxu0
        %v1901 = vadd.f32 0.0, %v1900
        %1902 = vdwg.mxu0
        %1903 = vmatpush.msra.mxu0 0.0
        %1904 = vmatpush.msra.mxu0 0.0
        %1905 = vmatpush.msra.mxu0 0.0
        %1906 = vmatpush.msra.mxu0 0.0
        %1907 = vmatpush.msra.mxu0 0.0
        %1908 = vmatpush.msra.mxu0 0.0
        %1909 = vmatpush.msra.mxu0 0.0
        %1910 = vmatpush.msra.mxu0 0.0
        %1911 = vmatpush.msra.mxu0 0.0
        %1912 = vmatpush.msra.mxu0 0.0
        %1913 = vmatpush.msra.mxu0 0.0
        %1914 = vmatpush.msra.mxu0 0.0
        %1915 = vmatpush.msra.mxu0 0.0
        %1916 = vmatpush.msra.mxu0 0.0
        %1917 = vmatpush.msra.mxu0 0.0
        %v1918 = vand.u32 %v1693, 4294901760
        %v1919 = vsub.f32 %v1693, %v1918
        %v1920 = vand.u32 %v1919, 4294901760
        %v1921 = vsub.f32 %v1919, %v1920
        %v1922 = vand.u32 %v1921, 4294901760
        %1923 = vmatpush.msra.mxu0 %v1922
        %v1924 = vand.u32 %v1875, 4294901760
        %1925 = vmatmul.f32.gmra.mxu0 %v1924
        %v1926 = vpop.f32.mrf.mxu0
        %v1927 = vadd.f32 %v1901, %v1926
        %1928 = vdwg.mxu0
        %1929 = vmatpush.msra.mxu0 0.0
        %1930 = vmatpush.msra.mxu0 0.0
        %1931 = vmatpush.msra.mxu0 0.0
        %1932 = vmatpush.msra.mxu0 0.0
        %1933 = vmatpush.msra.mxu0 0.0
        %1934 = vmatpush.msra.mxu0 0.0
        %1935 = vmatpush.msra.mxu0 0.0
        %1936 = vmatpush.msra.mxu0 0.0
        %1937 = vmatpush.msra.mxu0 0.0
        %1938 = vmatpush.msra.mxu0 0.0
        %1939 = vmatpush.msra.mxu0 0.0
        %1940 = vmatpush.msra.mxu0 0.0
        %1941 = vmatpush.msra.mxu0 0.0
        %1942 = vmatpush.msra.mxu0 0.0
        %1943 = vmatpush.msra.mxu0 0.0
        %v1944 = vand.u32 %v1693, 4294901760
        %v1945 = vsub.f32 %v1693, %v1944
        %1946 = vmatpush.msra.mxu0 %v1945
        %v1947 = vand.u32 %v1875, 4294901760
        %v1948 = vsub.f32 %v1875, %v1947
        %1949 = vmatmul.f32.gmra.mxu0 %v1948
        %v1950 = vpop.f32.mrf.mxu0
        %v1951 = vadd.f32 %v1927, %v1950
        %1952 = vdwg.mxu0
        %1953 = vmatpush.msra.mxu0 0.0
        %1954 = vmatpush.msra.mxu0 0.0
        %1955 = vmatpush.msra.mxu0 0.0
        %1956 = vmatpush.msra.mxu0 0.0
        %1957 = vmatpush.msra.mxu0 0.0
        %1958 = vmatpush.msra.mxu0 0.0
        %1959 = vmatpush.msra.mxu0 0.0
        %1960 = vmatpush.msra.mxu0 0.0
        %1961 = vmatpush.msra.mxu0 0.0
        %1962 = vmatpush.msra.mxu0 0.0
        %1963 = vmatpush.msra.mxu0 0.0
        %1964 = vmatpush.msra.mxu0 0.0
        %1965 = vmatpush.msra.mxu0 0.0
        %1966 = vmatpush.msra.mxu0 0.0
        %1967 = vmatpush.msra.mxu0 0.0
        %v1968 = vand.u32 %v1693, 4294901760
        %1969 = vmatpush.msra.mxu0 %v1968
        %v1970 = vand.u32 %v1875, 4294901760
        %v1971 = vsub.f32 %v1875, %v1970
        %v1972 = vand.u32 %v1971, 4294901760
        %1973 = vmatmul.f32.gmra.mxu0 %v1972
        %v1974 = vpop.f32.mrf.mxu0
        %v1975 = vadd.f32 %v1951, %v1974
        %1976 = vdwg.mxu0
        %1977 = vmatpush.msra.mxu0 0.0
        %1978 = vmatpush.msra.mxu0 0.0
        %1979 = vmatpush.msra.mxu0 0.0
        %1980 = vmatpush.msra.mxu0 0.0
        %1981 = vmatpush.msra.mxu0 0.0
        %1982 = vmatpush.msra.mxu0 0.0
        %1983 = vmatpush.msra.mxu0 0.0
        %1984 = vmatpush.msra.mxu0 0.0
        %1985 = vmatpush.msra.mxu0 0.0
        %1986 = vmatpush.msra.mxu0 0.0
        %1987 = vmatpush.msra.mxu0 0.0
        %1988 = vmatpush.msra.mxu0 0.0
        %1989 = vmatpush.msra.mxu0 0.0
        %1990 = vmatpush.msra.mxu0 0.0
        %1991 = vmatpush.msra.mxu0 0.0
        %v1992 = vand.u32 %v1693, 4294901760
        %v1993 = vsub.f32 %v1693, %v1992
        %v1994 = vand.u32 %v1993, 4294901760
        %1995 = vmatpush.msra.mxu0 %v1994
        %v1996 = vand.u32 %v1875, 4294901760
        %1997 = vmatmul.f32.gmra.mxu0 %v1996
        %v1998 = vpop.f32.mrf.mxu0
        %v1999 = vadd.f32 %v1975, %v1998
        %2000 = vdwg.mxu0
        %2001 = vmatpush.msra.mxu0 0.0
        %2002 = vmatpush.msra.mxu0 0.0
        %2003 = vmatpush.msra.mxu0 0.0
        %2004 = vmatpush.msra.mxu0 0.0
        %2005 = vmatpush.msra.mxu0 0.0
        %2006 = vmatpush.msra.mxu0 0.0
        %2007 = vmatpush.msra.mxu0 0.0
        %2008 = vmatpush.msra.mxu0 0.0
        %2009 = vmatpush.msra.mxu0 0.0
        %2010 = vmatpush.msra.mxu0 0.0
        %2011 = vmatpush.msra.mxu0 0.0
        %2012 = vmatpush.msra.mxu0 0.0
        %2013 = vmatpush.msra.mxu0 0.0
        %2014 = vmatpush.msra.mxu0 0.0
        %2015 = vmatpush.msra.mxu0 0.0
        %v2016 = vand.u32 %v1693, 4294901760
        %2017 = vmatpush.msra.mxu0 %v2016
        %v2018 = vand.u32 %v1875, 4294901760
        %2019 = vmatmul.f32.gmra.mxu0 %v2018
        %v2020 = vpop.f32.mrf.mxu0
        %v2021 = vadd.f32 %v1999, %v2020
        %2022 = vdwg.mxu0
        %v2023 = vld [vmem:[#allocation2] sm:$0xff]
        %v2024 = vld [vmem:[%s603] sm:$0xff]
        %v2025 = vld [vmem:[%s603 + $0x8] sm:$0xff]
        %v2026 = vld [vmem:[%s603 + $0x10] sm:$0xff]
        %v2027 = vld [vmem:[%s603 + $0x18] sm:$0xff]
        %v2029 = vsel %vm1696, %v2021, 0
        %2031 = vmatpush.msra.mxu0 0.0
        %2032 = vmatpush.msra.mxu0 0.0
        %2033 = vmatpush.msra.mxu0 0.0
        %2034 = vmatpush.msra.mxu0 0.0
        %2035 = vmatpush.msra.mxu0 0.0
        %2036 = vmatpush.msra.mxu0 0.0
        %2037 = vmatpush.msra.mxu0 0.0
        %2038 = vmatpush.msra.mxu0 0.0
        %2039 = vmatpush.msra.mxu0 0.0
        %2040 = vmatpush.msra.mxu0 0.0
        %2041 = vmatpush.msra.mxu0 0.0
        %2042 = vmatpush.msra.mxu0 0.0
        %v2043 = vand.u32 %v2027, 4294901760
        %2044 = vmatpush.msra.mxu0 %v2043
        %v2045 = vand.u32 %v2026, 4294901760
        %2046 = vmatpush.msra.mxu0 %v2045
        %v2047 = vand.u32 %v2025, 4294901760
        %2048 = vmatpush.msra.mxu0 %v2047
        %v2049 = vand.u32 %v2024, 4294901760
        %2050 = vmatpush.msra.mxu0 %v2049
        %v2051 = vand.u32 %v2029, 4294901760
        %v2052 = vsub.f32 %v2029, %v2051
        %v2053 = vand.u32 %v2052, 4294901760
        %v2054 = vsub.f32 %v2052, %v2053
        %v2055 = vand.u32 %v2054, 4294901760
        %2056 = vmatmul.f32.gmra.mxu0 %v2055
        %v2057 = vpop.f32.mrf.mxu0
        %v2058 = vadd.f32 0.0, %v2057
        %2059 = vdwg.mxu0
        %2060 = vmatpush.msra.mxu0 0.0
        %2061 = vmatpush.msra.mxu0 0.0
        %2062 = vmatpush.msra.mxu0 0.0
        %2063 = vmatpush.msra.mxu0 0.0
        %2064 = vmatpush.msra.mxu0 0.0
        %2065 = vmatpush.msra.mxu0 0.0
        %2066 = vmatpush.msra.mxu0 0.0
        %2067 = vmatpush.msra.mxu0 0.0
        %2068 = vmatpush.msra.mxu0 0.0
        %2069 = vmatpush.msra.mxu0 0.0
        %2070 = vmatpush.msra.mxu0 0.0
        %2071 = vmatpush.msra.mxu0 0.0
        %v2072 = vand.u32 %v2027, 4294901760
        %v2073 = vsub.f32 %v2027, %v2072
        %v2074 = vand.u32 %v2073, 4294901760
        %v2075 = vsub.f32 %v2073, %v2074
        %v2076 = vand.u32 %v2075, 4294901760
        %2077 = vmatpush.msra.mxu0 %v2076
        %v2078 = vand.u32 %v2026, 4294901760
        %v2079 = vsub.f32 %v2026, %v2078
        %v2080 = vand.u32 %v2079, 4294901760
        %v2081 = vsub.f32 %v2079, %v2080
        %v2082 = vand.u32 %v2081, 4294901760
        %2083 = vmatpush.msra.mxu0 %v2082
        %v2084 = vand.u32 %v2025, 4294901760
        %v2085 = vsub.f32 %v2025, %v2084
        %v2086 = vand.u32 %v2085, 4294901760
        %v2087 = vsub.f32 %v2085, %v2086
        %v2088 = vand.u32 %v2087, 4294901760
        %2089 = vmatpush.msra.mxu0 %v2088
        %v2090 = vand.u32 %v2024, 4294901760
        %v2091 = vsub.f32 %v2024, %v2090
        %v2092 = vand.u32 %v2091, 4294901760
        %v2093 = vsub.f32 %v2091, %v2092
        %v2094 = vand.u32 %v2093, 4294901760
        %2095 = vmatpush.msra.mxu0 %v2094
        %v2096 = vand.u32 %v2029, 4294901760
        %2097 = vmatmul.f32.gmra.mxu0 %v2096
        %v2098 = vpop.f32.mrf.mxu0
        %v2099 = vadd.f32 %v2058, %v2098
        %2100 = vdwg.mxu0
        %2101 = vmatpush.msra.mxu0 0.0
        %2102 = vmatpush.msra.mxu0 0.0
        %2103 = vmatpush.msra.mxu0 0.0
        %2104 = vmatpush.msra.mxu0 0.0
        %2105 = vmatpush.msra.mxu0 0.0
        %2106 = vmatpush.msra.mxu0 0.0
        %2107 = vmatpush.msra.mxu0 0.0
        %2108 = vmatpush.msra.mxu0 0.0
        %2109 = vmatpush.msra.mxu0 0.0
        %2110 = vmatpush.msra.mxu0 0.0
        %2111 = vmatpush.msra.mxu0 0.0
        %2112 = vmatpush.msra.mxu0 0.0
        %v2113 = vand.u32 %v2027, 4294901760
        %v2114 = vsub.f32 %v2027, %v2113
        %2115 = vmatpush.msra.mxu0 %v2114
        %v2116 = vand.u32 %v2026, 4294901760
        %v2117 = vsub.f32 %v2026, %v2116
        %2118 = vmatpush.msra.mxu0 %v2117
        %v2119 = vand.u32 %v2025, 4294901760
        %v2120 = vsub.f32 %v2025, %v2119
        %2121 = vmatpush.msra.mxu0 %v2120
        %v2122 = vand.u32 %v2024, 4294901760
        %v2123 = vsub.f32 %v2024, %v2122
        %2124 = vmatpush.msra.mxu0 %v2123
        %v2125 = vand.u32 %v2029, 4294901760
        %v2126 = vsub.f32 %v2029, %v2125
        %2127 = vmatmul.f32.gmra.mxu0 %v2126
        %v2128 = vpop.f32.mrf.mxu0
        %v2129 = vadd.f32 %v2099, %v2128
        %2130 = vdwg.mxu0
        %2131 = vmatpush.msra.mxu0 0.0
        %2132 = vmatpush.msra.mxu0 0.0
        %2133 = vmatpush.msra.mxu0 0.0
        %2134 = vmatpush.msra.mxu0 0.0
        %2135 = vmatpush.msra.mxu0 0.0
        %2136 = vmatpush.msra.mxu0 0.0
        %2137 = vmatpush.msra.mxu0 0.0
        %2138 = vmatpush.msra.mxu0 0.0
        %2139 = vmatpush.msra.mxu0 0.0
        %2140 = vmatpush.msra.mxu0 0.0
        %2141 = vmatpush.msra.mxu0 0.0
        %2142 = vmatpush.msra.mxu0 0.0
        %v2143 = vand.u32 %v2027, 4294901760
        %2144 = vmatpush.msra.mxu0 %v2143
        %v2145 = vand.u32 %v2026, 4294901760
        %2146 = vmatpush.msra.mxu0 %v2145
        %v2147 = vand.u32 %v2025, 4294901760
        %2148 = vmatpush.msra.mxu0 %v2147
        %v2149 = vand.u32 %v2024, 4294901760
        %2150 = vmatpush.msra.mxu0 %v2149
        %v2151 = vand.u32 %v2029, 4294901760
        %v2152 = vsub.f32 %v2029, %v2151
        %v2153 = vand.u32 %v2152, 4294901760
        %2154 = vmatmul.f32.gmra.mxu0 %v2153
        %v2155 = vpop.f32.mrf.mxu0
        %v2156 = vadd.f32 %v2129, %v2155
        %2157 = vdwg.mxu0
        %2158 = vmatpush.msra.mxu0 0.0
        %2159 = vmatpush.msra.mxu0 0.0
        %2160 = vmatpush.msra.mxu0 0.0
        %2161 = vmatpush.msra.mxu0 0.0
        %2162 = vmatpush.msra.mxu0 0.0
        %2163 = vmatpush.msra.mxu0 0.0
        %2164 = vmatpush.msra.mxu0 0.0
        %2165 = vmatpush.msra.mxu0 0.0
        %2166 = vmatpush.msra.mxu0 0.0
        %2167 = vmatpush.msra.mxu0 0.0
        %2168 = vmatpush.msra.mxu0 0.0
        %2169 = vmatpush.msra.mxu0 0.0
        %v2170 = vand.u32 %v2027, 4294901760
        %v2171 = vsub.f32 %v2027, %v2170
        %v2172 = vand.u32 %v2171, 4294901760
        %2173 = vmatpush.msra.mxu0 %v2172
        %v2174 = vand.u32 %v2026, 4294901760
        %v2175 = vsub.f32 %v2026, %v2174
        %v2176 = vand.u32 %v2175, 4294901760
        %2177 = vmatpush.msra.mxu0 %v2176
        %v2178 = vand.u32 %v2025, 4294901760
        %v2179 = vsub.f32 %v2025, %v2178
        %v2180 = vand.u32 %v2179, 4294901760
        %2181 = vmatpush.msra.mxu0 %v2180
        %v2182 = vand.u32 %v2024, 4294901760
        %v2183 = vsub.f32 %v2024, %v2182
        %v2184 = vand.u32 %v2183, 4294901760
        %2185 = vmatpush.msra.mxu0 %v2184
        %v2186 = vand.u32 %v2029, 4294901760
        %2187 = vmatmul.f32.gmra.mxu0 %v2186
        %v2188 = vpop.f32.mrf.mxu0
        %v2189 = vadd.f32 %v2156, %v2188
        %2190 = vdwg.mxu0
        %2191 = vmatpush.msra.mxu0 0.0
        %2192 = vmatpush.msra.mxu0 0.0
        %2193 = vmatpush.msra.mxu0 0.0
        %2194 = vmatpush.msra.mxu0 0.0
        %2195 = vmatpush.msra.mxu0 0.0
        %2196 = vmatpush.msra.mxu0 0.0
        %2197 = vmatpush.msra.mxu0 0.0
        %2198 = vmatpush.msra.mxu0 0.0
        %2199 = vmatpush.msra.mxu0 0.0
        %2200 = vmatpush.msra.mxu0 0.0
        %2201 = vmatpush.msra.mxu0 0.0
        %2202 = vmatpush.msra.mxu0 0.0
        %v2203 = vand.u32 %v2027, 4294901760
        %2204 = vmatpush.msra.mxu0 %v2203
        %v2205 = vand.u32 %v2026, 4294901760
        %2206 = vmatpush.msra.mxu0 %v2205
        %v2207 = vand.u32 %v2025, 4294901760
        %2208 = vmatpush.msra.mxu0 %v2207
        %v2209 = vand.u32 %v2024, 4294901760
        %2210 = vmatpush.msra.mxu0 %v2209
        %v2211 = vand.u32 %v2029, 4294901760
        %2212 = vmatmul.f32.gmra.mxu0 %v2211
        %v2213 = vpop.f32.mrf.mxu0
        %v2214 = vadd.f32 %v2189, %v2213
        %2215 = vdwg.mxu0
        %v2216 = vadd.f32 %v2023, %v2214
        %2217 = vst [vmem:[#allocation2] sm:$0xff] %v2216
        %p2218 = scmp.eq.s32.totalorder %s32, 3
        // Predicated region
        $region77: #{tpu_custom_call.1} parent=71 // pred_check
          %p2219 = pneg %p2218
        $region78: #{tpu_custom_call.1} parent=71 // pred_check_branch
          %2221 = sbr.rel (%p2219) target = $region80
        $region79: #{tpu_custom_call.1} parent=71 // pred_region
          %v2222 = vld [vmem:[#allocation2] sm:$0xff]
          %v2223 = vld [vmem:[%s10] sm:$0x1]
          %v2225 = vperm.slane %v2223, 0
          %v2227 = vadd.f32 %v2222, %v2225
          %v2228 = vadd.f32 %v2227, %v611
          %2229 = vadd.xlane.f32.xlu0 %v2228
          %v2230 = vpop.xlane.xlu0 %2229
          %v2231 = vrcp.pop 128.0
          %v2232 = vmul.f32 128.0, %v2231
          %v2233 = vsub.f32 1.0, %v2232
          %v2234 = vmul.f32 %v2231, %v2233
          %v2235 = vadd.f32 %v2231, %v2234
          %vm2236 = vweird.f32 %v2231
          %v2237 = vsel %vm2236, %v2231, %v2235
          %v2238 = vmul.f32 %v2230, %v2237
          %v2239 = vsub.f32 %v2228, %v2238
          %v2240 = vmul.f32 %v2239, %v2239
          %2241 = vadd.xlane.f32.xlu0 %v2240
          %v2242 = vpop.xlane.xlu0 %2241
          %v2243 = vmul.f32 %v2242, %v2237
          %v2244 = vadd.f32 %v2243, 1e-05
          %v2245 = vrsqrt.pop %v2244
          %v2246 = vmul.f32 %v2245, %v2244
          %v2247 = vmul.f32 %v2246, %v2245
          %v2248 = vmul.f32 0.5, %v2247
          %v2249 = vsub.f32 1.5, %v2248
          %v2250 = vmul.f32 %v2245, %v2249
          %vm2251 = vweird.f32 %v2244
          %vm2252 = vweird.f32 %v2245
          %vm2253 = vmor %vm2251, %vm2252
          %v2254 = vsel %vm2253, %v2245, %v2250
          %v2255 = vmul.f32 %v2239, %v2254
          %v2256 = vld [vmem:[%s11] sm:$0x1]
          %v2258 = vperm.slane %v2256, 0
          %v2260 = vmul.f32 %v2255, %v2258
          %v2261 = vld [vmem:[%s12] sm:$0x1]
          %v2263 = vperm.slane %v2261, 0
          %v2265 = vadd.f32 %v2260, %v2263
          %2266 = vst [vmem:[%s562] sm:$0xff] %v2265
        $region80: #{tpu_custom_call.1} parent=71 // pred_fallthru
          _
        %s2267 = sand.u32 %s370, 1
        %s2268 = scalar_lea.sflag [#allocation4], %s2267
        %s2269 = sand.u32 %s370, 1
        %s2270 = smul.addr %s2269, 8
        %s2271 = scalar_lea.vmem [#allocation3], %s2270
        // Predicated region
        $region81: #{tpu_custom_call.1} parent=71 // pred_check
          %p2272 = pneg %p380
        $region82: #{tpu_custom_call.1} parent=71 // pred_check_branch
          %2274 = sbr.rel (%p2272) target = $region84
        $region83: #{tpu_custom_call.1} parent=71 // pred_region
          %2276 = vsyncadd %s2268, 0
          %s2277 = smul.addr %s31, 8
          %s2278 = scalar_lea.hbm %s13, %s2277
          %s2280 = sshll.u32 %s2271, 4
          %s2281 = int_to_ptr.vmem [resolvable:$true] %s2280
          %s2282 = sshll.u32 %s2278, 4
          %s2283 = int_to_ptr.hbm [resolvable:$true] %s2282
          %2285 = dma.vmem_to_hbm [thread:$0]  %s2281, 128, %s2283, %s2268
        $region84: #{tpu_custom_call.1} parent=71 // pred_fallthru
          _
      $region72: #{tpu_custom_call.1} parent=5 // pred_fallthru
        _
      %p2286 = scmp.le.s32.totalorder 2, %s22
      // Predicated region
      $region85: #{tpu_custom_call.1} parent=5 // pred_check
        %p2287 = pneg %p2286
      $region86: #{tpu_custom_call.1} parent=5 // pred_check_branch
        %2289 = sbr.rel (%p2287) target = $region88
      $region87: #{tpu_custom_call.1} parent=5 // pred_region
        %s2290 = ssub.s32 %s22, 2
        // Predicated region
        $region89: #{tpu_custom_call.1} parent=87 // pred_check
          %p2291 = pneg %p386
        $region90: #{tpu_custom_call.1} parent=87 // pred_check_branch
          %2293 = sbr.rel (%p2291) target = $region92
        $region91: #{tpu_custom_call.1} parent=87 // pred_region
          %s2294 = sand.u32 %s371, 1
          %s2295 = scalar_lea.sflag [#allocation4], %s2294
          %s2296 = sand.u32 %s371, 1
          %s2297 = smul.addr %s2296, 8
          %s2298 = scalar_lea.vmem [#allocation3], %s2297
          %2300 = dma.done %s2295, 128
        $region92: #{tpu_custom_call.1} parent=87 // pred_fallthru
          _
      $region88: #{tpu_custom_call.1} parent=5 // pred_fallthru
        _
    $region6: #{tpu_custom_call.1} parent=1 // loop_footer
      %s26 = sadd.s32 1, %s22
    $region7: #{tpu_custom_call.1} parent=1 // loop_footer_branch
      %21 = sbr.rel target = $region3
    $region8: #{tpu_custom_call.1} parent=1 // loop_exit
      _
    %2301 = vsyncpa [#allocation4], 1
    %s2302 = scalar_lea.sflag [#allocation4], 1
    %2303 = vsyncpa %s2302, 1

</llo_original>
